<compile_context>
chip_gen: v7x
topology: tpu7x:2x2x1
jax: 0.10.0
libtpu: 0.0.40
codegen_flags: <defaults>
</compile_context>

<pallas_src>
import jax
import jax.numpy as jnp
from jax.experimental import pallas as pl
from jax.experimental.pallas import tpu as pltpu


def _round_up(x, m):
    return ((x + m - 1) // m) * m


def _pick_batch_tile(B):
    """Batch tile: one step for small B; >=2 roughly-equal steps for larger B
    (v7x megacore), capped at 1024 rows (v5e scoped-VMEM headroom)."""
    b8 = _round_up(max(B, 1), 8)
    if b8 <= 256:
        return b8
    half = _round_up((b8 + 1) // 2, 128)
    return max(128, min(1024, half))


def _dnn_kernel(ids_ref, emb_ref, w1_ref, b1_ref, w2_ref, b2_ref, w3_ref, b3_ref,
                o_ref, x_scr):
    TB, L = ids_ref.shape          # batch tile, sequence length (static)
    V, E = emb_ref.shape           # padded vocab, embed size (static)

    ids = ids_ref[...]                                            # (TB, L) int32
    emb = emb_ref[...]                                            # (V, E)  bf16
    vocab_iota = jax.lax.broadcasted_iota(jnp.int32, (TB, V), 1)  # (TB, V)

    # Fused embedding gather + flatten: one-hot(ids[:, l]) @ emb, one MXU
    # matmul per position (L is small and static -> Python-unrolled).
    for l in range(L):
        onehot = (ids[:, l:l + 1] == vocab_iota).astype(jnp.bfloat16)   # (TB, V)
        row = jnp.dot(onehot, emb, preferred_element_type=jnp.float32)  # (TB, E) f32
        x_scr[:, l * E:(l + 1) * E] = row.astype(jnp.bfloat16)

    x = x_scr[...]                                                # (TB, L*E) bf16

    # fc1 + ReLU : bf16 matmul, f32 accumulate, bias+ReLU in f32.
    h1 = jnp.dot(x, w1_ref[...], preferred_element_type=jnp.float32)
    h1 = jnp.maximum(h1 + b1_ref[...], 0.0).astype(jnp.bfloat16)
    # (dropout = identity in eval mode)
    # fc2 + ReLU
    h2 = jnp.dot(h1, w2_ref[...], preferred_element_type=jnp.float32)
    h2 = jnp.maximum(h2 + b2_ref[...], 0.0).astype(jnp.bfloat16)
    # (dropout = identity in eval mode)
    # fc3 (logits, no activation) -> lane-dense padded output
    out = jnp.dot(h2, w3_ref[...], preferred_element_type=jnp.float32)
    o_ref[...] = (out + b3_ref[...]).astype(o_ref.dtype)


def dnn_classifier_forward(input_ids, params):
    """Forward pass of DNNClassifier.

    input_ids: (B, max_len) int32
    params: dict with embedding table and (in, out)-layout linear weights (f32).
    Returns logits of shape (B, num_classes), float32.
    """
    emb = params["embedding"]            # (vocab_size, embed_size) f32
    w1, b1 = params["w1"], params["b1"]  # (E*L, 512), (1, 512)
    w2, b2 = params["w2"], params["b2"]  # (512, 256), (1, 256)
    w3, b3 = params["w3"], params["b3"]  # (256, C),  (1, C)

    B, L = input_ids.shape
    V, E = emb.shape
    IN1 = L * E
    H1 = w1.shape[1]
    H2 = w2.shape[1]
    C = w3.shape[1]

    # --- padding for lane density (vocab -> one-hot K dim, classes -> out) ---
    V_pad = _round_up(V, 128)
    C_pad = _round_up(C, 128)

    emb_b = jnp.pad(emb, ((0, V_pad - V), (0, 0))).astype(jnp.bfloat16)
    w1_b = w1.astype(jnp.bfloat16)
    w2_b = w2.astype(jnp.bfloat16)
    w3_b = jnp.pad(w3, ((0, 0), (0, C_pad - C))).astype(jnp.bfloat16)
    b1_f = b1.reshape(1, H1).astype(jnp.float32)
    b2_f = b2.reshape(1, H2).astype(jnp.float32)
    b3_f = jnp.pad(b3.reshape(1, C), ((0, 0), (0, C_pad - C))).astype(jnp.float32)

    ids = input_ids.astype(jnp.int32)

    # --- batch tiling: no padding copy, ragged last tile handled by Pallas ---
    TB = _pick_batch_tile(B)
    grid = (pl.cdiv(B, TB),)

    flops = 2 * B * (L * V_pad * E + IN1 * H1 + H1 * H2 + H2 * C_pad)
    bytes_accessed = (
        ids.size * 4
        + (emb_b.size + w1_b.size + w2_b.size + w3_b.size) * 2   # bf16 table+weights
        + (b1_f.size + b2_f.size + b3_f.size) * 4                # f32 biases
        + B * C_pad * 4                                          # f32 logits out
    )

    mlp = pl.pallas_call(
        _dnn_kernel,
        out_shape=jax.ShapeDtypeStruct((B, C_pad), jnp.float32),
        grid_spec=pltpu.PrefetchScalarGridSpec(
            num_scalar_prefetch=0,
            grid=grid,
            in_specs=[
                pl.BlockSpec((TB, L), lambda i: (i, 0)),        # ids: tiled on batch
                pl.BlockSpec((V_pad, E), lambda i: (0, 0)),     # embedding table resident
                pl.BlockSpec((IN1, H1), lambda i: (0, 0)),      # weights resident
                pl.BlockSpec((1, H1), lambda i: (0, 0)),
                pl.BlockSpec((H1, H2), lambda i: (0, 0)),
                pl.BlockSpec((1, H2), lambda i: (0, 0)),
                pl.BlockSpec((H2, C_pad), lambda i: (0, 0)),
                pl.BlockSpec((1, C_pad), lambda i: (0, 0)),
            ],
            out_specs=pl.BlockSpec((TB, C_pad), lambda i: (i, 0)),
            scratch_shapes=[pltpu.VMEM((TB, IN1), jnp.bfloat16)],  # flattened activation
        ),
        compiler_params=pltpu.CompilerParams(
            dimension_semantics=("parallel",),
            vmem_limit_bytes=32 * 1024 * 1024),
        cost_estimate=pl.CostEstimate(
            flops=int(flops), transcendentals=0,
            bytes_accessed=int(bytes_accessed)),
    )
    logits_padded = mlp(ids, emb_b, w1_b, b1_f, w2_b, b2_f, w3_b, b3_f)
    return logits_padded[:, :C]


def init_params(key, vocab_size, embed_size, num_classes, max_len):
    """Deterministic synthetic parameter init (shapes match the PyTorch module).

    Linear weights are stored as (in_features, out_features) so the kernel
    computes x @ W + b (equivalent to PyTorch's x @ W.T with W=(out, in)).
    """
    ks = jax.random.split(key, 7)
    in1 = embed_size * max_len

    def uni(k, shape, fan_in):
        bound = 1.0 / jnp.sqrt(jnp.float32(fan_in))
        return jax.random.uniform(k, shape, jnp.float32, -bound, bound)

    return {
        "embedding": jax.random.normal(ks[0], (vocab_size, embed_size), jnp.float32),
        "w1": uni(ks[1], (in1, 512), in1),
        "b1": uni(ks[2], (1, 512), in1),
        "w2": uni(ks[3], (512, 256), 512),
        "b2": uni(ks[4], (1, 256), 512),
        "w3": uni(ks[5], (256, num_classes), 256),
        "b3": uni(ks[6], (1, num_classes), 256),
    }


if __name__ == "__main__":
    vocab_size, embed_size, num_classes, max_len = 100, 32, 10, 8
    batch = 2

    key = jax.random.PRNGKey(0)
    k_param, k_ids = jax.random.split(key)
    params = init_params(k_param, vocab_size, embed_size, num_classes, max_len)
    input_ids = jax.random.randint(k_ids, (batch, max_len), 0, vocab_size, jnp.int32)

    logits = jax.jit(dnn_classifier_forward)(input_ids, params)
    jax.block_until_ready(logits)

    # Pure-JAX f32 reference (eval-mode dropout) for a loose numerical check
    # (bf16 weights/activations with f32 accumulation -> tolerance, not exact).
    x_ref = jnp.take(params["embedding"], input_ids, axis=0).reshape(batch, -1)
    h1_ref = jnp.maximum(x_ref @ params["w1"] + params["b1"], 0.0)
    h2_ref = jnp.maximum(h1_ref @ params["w2"] + params["b2"], 0.0)
    ref = h2_ref @ params["w3"] + params["b3"]

    assert logits.shape == (batch, num_classes)
    assert logits.dtype == jnp.float32
    assert bool(jnp.all(jnp.isfinite(logits)))
    assert float(jnp.max(jnp.abs(logits - ref))) < 5e-2
    print("KERNEL_OK")
</pallas_src>

<mosaic_0001>
module attributes {stable_mosaic.version = 11 : i64} {
  func.func @_dnn_kernel(%arg0: i32, %arg1: memref<8x8xi32, #tpu.memory_space<vmem>>, %arg2: memref<128x32xbf16, #tpu.memory_space<vmem>>, %arg3: memref<256x512xbf16, #tpu.memory_space<vmem>>, %arg4: memref<1x512xf32, #tpu.memory_space<vmem>>, %arg5: memref<512x256xbf16, #tpu.memory_space<vmem>>, %arg6: memref<1x256xf32, #tpu.memory_space<vmem>>, %arg7: memref<256x128xbf16, #tpu.memory_space<vmem>>, %arg8: memref<1x128xf32, #tpu.memory_space<vmem>>, %arg9: memref<8x128xf32, #tpu.memory_space<vmem>>, %arg10: memref<8x256xbf16, #tpu.memory_space<vmem>>) attributes {dimension_semantics = [#tpu.dimension_semantics<parallel>], iteration_bounds = array<i64: 1>, scalar_prefetch = 0 : i64, scratch_operands = 1 : i64, tpu.core_type = #tpu.core_type<tc>, window_params = [{transform_indices = @transform_0, window_bounds = array<i64: 8, 8>}, {pipeline_mode = #tpu.pipeline_mode<synchronous>, transform_indices = @transform_1, window_bounds = array<i64: 128, 32>}, {pipeline_mode = #tpu.pipeline_mode<synchronous>, transform_indices = @transform_2, window_bounds = array<i64: 256, 512>}, {pipeline_mode = #tpu.pipeline_mode<synchronous>, transform_indices = @transform_3, window_bounds = array<i64: 1, 512>}, {pipeline_mode = #tpu.pipeline_mode<synchronous>, transform_indices = @transform_4, window_bounds = array<i64: 512, 256>}, {pipeline_mode = #tpu.pipeline_mode<synchronous>, transform_indices = @transform_5, window_bounds = array<i64: 1, 256>}, {pipeline_mode = #tpu.pipeline_mode<synchronous>, transform_indices = @transform_6, window_bounds = array<i64: 256, 128>}, {pipeline_mode = #tpu.pipeline_mode<synchronous>, transform_indices = @transform_7, window_bounds = array<i64: 1, 128>}, {transform_indices = @transform_8, window_bounds = array<i64: 8, 128>}]} {
    %c0 = arith.constant 0 : index
    %c0_0 = arith.constant 0 : index
    %0 = vector.load %arg1[%c0, %c0_0] : memref<8x8xi32, #tpu.memory_space<vmem>>, vector<8x8xi32>
    %c0_1 = arith.constant 0 : index
    %c0_2 = arith.constant 0 : index
    %1 = vector.load %arg2[%c0_1, %c0_2] : memref<128x32xbf16, #tpu.memory_space<vmem>>, vector<128x32xbf16>
    %2 = tpu.iota {dimensions = array<i32: 1>} : vector<8x128xi32>
    %3 = vector.extract_strided_slice %0 {offsets = [0, 0], sizes = [8, 1], strides = [1, 1]} : vector<8x8xi32> to vector<8x1xi32>
    %4 = vector.broadcast %3 : vector<8x1xi32> to vector<8x128xi32>
    %5 = arith.cmpi eq, %4, %2 : vector<8x128xi32>
    %6 = arith.extui %5 : vector<8x128xi1> to vector<8x128xi32>
    %7 = arith.sitofp %6 : vector<8x128xi32> to vector<8x128xf32>
    %8 = arith.truncf %7 : vector<8x128xf32> to vector<8x128xbf16>
    %cst = arith.constant dense<0.000000e+00> : vector<8x32xf32>
    %9 = tpu.matmul %8, %1, %cst {dimension_numbers = #tpu.dot_dimension_numbers<[1], [0], [0], [1], [0, 0, 1, 1], [], []>} : vector<8x128xbf16>, vector<128x32xbf16>, vector<8x32xf32> -> vector<8x32xf32>
    %10 = arith.truncf %9 : vector<8x32xf32> to vector<8x32xbf16>
    %c0_3 = arith.constant 0 : index
    %c0_4 = arith.constant 0 : index
    %11 = vector.load %arg10[%c0_3, %c0_4] : memref<8x256xbf16, #tpu.memory_space<vmem>>, vector<8x32xbf16>
    tpu.vector_store %arg10[%c0_3, %c0_4], %10 {strides = array<i32>} : memref<8x256xbf16, #tpu.memory_space<vmem>>, vector<8x32xbf16>,
    %12 = vector.extract_strided_slice %0 {offsets = [0, 1], sizes = [8, 1], strides = [1, 1]} : vector<8x8xi32> to vector<8x1xi32>
    %13 = vector.broadcast %12 : vector<8x1xi32> to vector<8x128xi32>
    %14 = arith.cmpi eq, %13, %2 : vector<8x128xi32>
    %15 = arith.extui %14 : vector<8x128xi1> to vector<8x128xi32>
    %16 = arith.sitofp %15 : vector<8x128xi32> to vector<8x128xf32>
    %17 = arith.truncf %16 : vector<8x128xf32> to vector<8x128xbf16>
    %cst_5 = arith.constant dense<0.000000e+00> : vector<8x32xf32>
    %18 = tpu.matmul %17, %1, %cst_5 {dimension_numbers = #tpu.dot_dimension_numbers<[1], [0], [0], [1], [0, 0, 1, 1], [], []>} : vector<8x128xbf16>, vector<128x32xbf16>, vector<8x32xf32> -> vector<8x32xf32>
    %19 = arith.truncf %18 : vector<8x32xf32> to vector<8x32xbf16>
    %c0_6 = arith.constant 0 : index
    %c32 = arith.constant 32 : index
    %20 = vector.load %arg10[%c0_6, %c32] : memref<8x256xbf16, #tpu.memory_space<vmem>>, vector<8x32xbf16>
    tpu.vector_store %arg10[%c0_6, %c32], %19 {strides = array<i32>} : memref<8x256xbf16, #tpu.memory_space<vmem>>, vector<8x32xbf16>,
    %21 = vector.extract_strided_slice %0 {offsets = [0, 2], sizes = [8, 1], strides = [1, 1]} : vector<8x8xi32> to vector<8x1xi32>
    %22 = vector.broadcast %21 : vector<8x1xi32> to vector<8x128xi32>
    %23 = arith.cmpi eq, %22, %2 : vector<8x128xi32>
    %24 = arith.extui %23 : vector<8x128xi1> to vector<8x128xi32>
    %25 = arith.sitofp %24 : vector<8x128xi32> to vector<8x128xf32>
    %26 = arith.truncf %25 : vector<8x128xf32> to vector<8x128xbf16>
    %cst_7 = arith.constant dense<0.000000e+00> : vector<8x32xf32>
    %27 = tpu.matmul %26, %1, %cst_7 {dimension_numbers = #tpu.dot_dimension_numbers<[1], [0], [0], [1], [0, 0, 1, 1], [], []>} : vector<8x128xbf16>, vector<128x32xbf16>, vector<8x32xf32> -> vector<8x32xf32>
    %28 = arith.truncf %27 : vector<8x32xf32> to vector<8x32xbf16>
    %c0_8 = arith.constant 0 : index
    %c64 = arith.constant 64 : index
    %29 = vector.load %arg10[%c0_8, %c64] : memref<8x256xbf16, #tpu.memory_space<vmem>>, vector<8x32xbf16>
    tpu.vector_store %arg10[%c0_8, %c64], %28 {strides = array<i32>} : memref<8x256xbf16, #tpu.memory_space<vmem>>, vector<8x32xbf16>,
    %30 = vector.extract_strided_slice %0 {offsets = [0, 3], sizes = [8, 1], strides = [1, 1]} : vector<8x8xi32> to vector<8x1xi32>
    %31 = vector.broadcast %30 : vector<8x1xi32> to vector<8x128xi32>
    %32 = arith.cmpi eq, %31, %2 : vector<8x128xi32>
    %33 = arith.extui %32 : vector<8x128xi1> to vector<8x128xi32>
    %34 = arith.sitofp %33 : vector<8x128xi32> to vector<8x128xf32>
    %35 = arith.truncf %34 : vector<8x128xf32> to vector<8x128xbf16>
    %cst_9 = arith.constant dense<0.000000e+00> : vector<8x32xf32>
    %36 = tpu.matmul %35, %1, %cst_9 {dimension_numbers = #tpu.dot_dimension_numbers<[1], [0], [0], [1], [0, 0, 1, 1], [], []>} : vector<8x128xbf16>, vector<128x32xbf16>, vector<8x32xf32> -> vector<8x32xf32>
    %37 = arith.truncf %36 : vector<8x32xf32> to vector<8x32xbf16>
    %c0_10 = arith.constant 0 : index
    %c96 = arith.constant 96 : index
    %38 = vector.load %arg10[%c0_10, %c96] : memref<8x256xbf16, #tpu.memory_space<vmem>>, vector<8x32xbf16>
    tpu.vector_store %arg10[%c0_10, %c96], %37 {strides = array<i32>} : memref<8x256xbf16, #tpu.memory_space<vmem>>, vector<8x32xbf16>,
    %39 = vector.extract_strided_slice %0 {offsets = [0, 4], sizes = [8, 1], strides = [1, 1]} : vector<8x8xi32> to vector<8x1xi32>
    %40 = vector.broadcast %39 : vector<8x1xi32> to vector<8x128xi32>
    %41 = arith.cmpi eq, %40, %2 : vector<8x128xi32>
    %42 = arith.extui %41 : vector<8x128xi1> to vector<8x128xi32>
    %43 = arith.sitofp %42 : vector<8x128xi32> to vector<8x128xf32>
    %44 = arith.truncf %43 : vector<8x128xf32> to vector<8x128xbf16>
    %cst_11 = arith.constant dense<0.000000e+00> : vector<8x32xf32>
    %45 = tpu.matmul %44, %1, %cst_11 {dimension_numbers = #tpu.dot_dimension_numbers<[1], [0], [0], [1], [0, 0, 1, 1], [], []>} : vector<8x128xbf16>, vector<128x32xbf16>, vector<8x32xf32> -> vector<8x32xf32>
    %46 = arith.truncf %45 : vector<8x32xf32> to vector<8x32xbf16>
    %c0_12 = arith.constant 0 : index
    %c128 = arith.constant 128 : index
    %47 = vector.load %arg10[%c0_12, %c128] : memref<8x256xbf16, #tpu.memory_space<vmem>>, vector<8x32xbf16>
    tpu.vector_store %arg10[%c0_12, %c128], %46 {strides = array<i32>} : memref<8x256xbf16, #tpu.memory_space<vmem>>, vector<8x32xbf16>,
    %48 = vector.extract_strided_slice %0 {offsets = [0, 5], sizes = [8, 1], strides = [1, 1]} : vector<8x8xi32> to vector<8x1xi32>
    %49 = vector.broadcast %48 : vector<8x1xi32> to vector<8x128xi32>
    %50 = arith.cmpi eq, %49, %2 : vector<8x128xi32>
    %51 = arith.extui %50 : vector<8x128xi1> to vector<8x128xi32>
    %52 = arith.sitofp %51 : vector<8x128xi32> to vector<8x128xf32>
    %53 = arith.truncf %52 : vector<8x128xf32> to vector<8x128xbf16>
    %cst_13 = arith.constant dense<0.000000e+00> : vector<8x32xf32>
    %54 = tpu.matmul %53, %1, %cst_13 {dimension_numbers = #tpu.dot_dimension_numbers<[1], [0], [0], [1], [0, 0, 1, 1], [], []>} : vector<8x128xbf16>, vector<128x32xbf16>, vector<8x32xf32> -> vector<8x32xf32>
    %55 = arith.truncf %54 : vector<8x32xf32> to vector<8x32xbf16>
    %c0_14 = arith.constant 0 : index
    %c160 = arith.constant 160 : index
    %56 = vector.load %arg10[%c0_14, %c160] : memref<8x256xbf16, #tpu.memory_space<vmem>>, vector<8x32xbf16>
    tpu.vector_store %arg10[%c0_14, %c160], %55 {strides = array<i32>} : memref<8x256xbf16, #tpu.memory_space<vmem>>, vector<8x32xbf16>,
    %57 = vector.extract_strided_slice %0 {offsets = [0, 6], sizes = [8, 1], strides = [1, 1]} : vector<8x8xi32> to vector<8x1xi32>
    %58 = vector.broadcast %57 : vector<8x1xi32> to vector<8x128xi32>
    %59 = arith.cmpi eq, %58, %2 : vector<8x128xi32>
    %60 = arith.extui %59 : vector<8x128xi1> to vector<8x128xi32>
    %61 = arith.sitofp %60 : vector<8x128xi32> to vector<8x128xf32>
    %62 = arith.truncf %61 : vector<8x128xf32> to vector<8x128xbf16>
    %cst_15 = arith.constant dense<0.000000e+00> : vector<8x32xf32>
    %63 = tpu.matmul %62, %1, %cst_15 {dimension_numbers = #tpu.dot_dimension_numbers<[1], [0], [0], [1], [0, 0, 1, 1], [], []>} : vector<8x128xbf16>, vector<128x32xbf16>, vector<8x32xf32> -> vector<8x32xf32>
    %64 = arith.truncf %63 : vector<8x32xf32> to vector<8x32xbf16>
    %c0_16 = arith.constant 0 : index
    %c192 = arith.constant 192 : index
    %65 = vector.load %arg10[%c0_16, %c192] : memref<8x256xbf16, #tpu.memory_space<vmem>>, vector<8x32xbf16>
    tpu.vector_store %arg10[%c0_16, %c192], %64 {strides = array<i32>} : memref<8x256xbf16, #tpu.memory_space<vmem>>, vector<8x32xbf16>,
    %66 = vector.extract_strided_slice %0 {offsets = [0, 7], sizes = [8, 1], strides = [1, 1]} : vector<8x8xi32> to vector<8x1xi32>
    %67 = vector.broadcast %66 : vector<8x1xi32> to vector<8x128xi32>
    %68 = arith.cmpi eq, %67, %2 : vector<8x128xi32>
    %69 = arith.extui %68 : vector<8x128xi1> to vector<8x128xi32>
    %70 = arith.sitofp %69 : vector<8x128xi32> to vector<8x128xf32>
    %71 = arith.truncf %70 : vector<8x128xf32> to vector<8x128xbf16>
    %cst_17 = arith.constant dense<0.000000e+00> : vector<8x32xf32>
    %72 = tpu.matmul %71, %1, %cst_17 {dimension_numbers = #tpu.dot_dimension_numbers<[1], [0], [0], [1], [0, 0, 1, 1], [], []>} : vector<8x128xbf16>, vector<128x32xbf16>, vector<8x32xf32> -> vector<8x32xf32>
    %73 = arith.truncf %72 : vector<8x32xf32> to vector<8x32xbf16>
    %c0_18 = arith.constant 0 : index
    %c224 = arith.constant 224 : index
    %74 = vector.load %arg10[%c0_18, %c224] : memref<8x256xbf16, #tpu.memory_space<vmem>>, vector<8x32xbf16>
    tpu.vector_store %arg10[%c0_18, %c224], %73 {strides = array<i32>} : memref<8x256xbf16, #tpu.memory_space<vmem>>, vector<8x32xbf16>,
    %c0_19 = arith.constant 0 : index
    %c0_20 = arith.constant 0 : index
    %75 = vector.load %arg10[%c0_19, %c0_20] : memref<8x256xbf16, #tpu.memory_space<vmem>>, vector<8x256xbf16>
    %c0_21 = arith.constant 0 : index
    %c0_22 = arith.constant 0 : index
    %76 = vector.load %arg3[%c0_21, %c0_22] : memref<256x512xbf16, #tpu.memory_space<vmem>>, vector<256x512xbf16>
    %cst_23 = arith.constant dense<0.000000e+00> : vector<8x512xf32>
    %77 = tpu.matmul %75, %76, %cst_23 {dimension_numbers = #tpu.dot_dimension_numbers<[1], [0], [0], [1], [0, 0, 1, 1], [], []>} : vector<8x256xbf16>, vector<256x512xbf16>, vector<8x512xf32> -> vector<8x512xf32>
    %c0_24 = arith.constant 0 : index
    %c0_25 = arith.constant 0 : index
    %78 = vector.load %arg4[%c0_24, %c0_25] : memref<1x512xf32, #tpu.memory_space<vmem>>, vector<1x512xf32>
    %79 = vector.broadcast %78 : vector<1x512xf32> to vector<8x512xf32>
    %80 = arith.addf %77, %79 : vector<8x512xf32>
    %cst_26 = arith.constant 0.000000e+00 : f32
    %81 = vector.broadcast %cst_26 : f32 to vector<8x512xf32>
    %82 = arith.maximumf %80, %81 : vector<8x512xf32>
    %83 = arith.truncf %82 : vector<8x512xf32> to vector<8x512xbf16>
    %c0_27 = arith.constant 0 : index
    %c0_28 = arith.constant 0 : index
    %84 = vector.load %arg5[%c0_27, %c0_28] : memref<512x256xbf16, #tpu.memory_space<vmem>>, vector<512x256xbf16>
    %cst_29 = arith.constant dense<0.000000e+00> : vector<8x256xf32>
    %85 = tpu.matmul %83, %84, %cst_29 {dimension_numbers = #tpu.dot_dimension_numbers<[1], [0], [0], [1], [0, 0, 1, 1], [], []>} : vector<8x512xbf16>, vector<512x256xbf16>, vector<8x256xf32> -> vector<8x256xf32>
    %c0_30 = arith.constant 0 : index
    %c0_31 = arith.constant 0 : index
    %86 = vector.load %arg6[%c0_30, %c0_31] : memref<1x256xf32, #tpu.memory_space<vmem>>, vector<1x256xf32>
    %87 = vector.broadcast %86 : vector<1x256xf32> to vector<8x256xf32>
    %88 = arith.addf %85, %87 : vector<8x256xf32>
    %cst_32 = arith.constant 0.000000e+00 : f32
    %89 = vector.broadcast %cst_32 : f32 to vector<8x256xf32>
    %90 = arith.maximumf %88, %89 : vector<8x256xf32>
    %91 = arith.truncf %90 : vector<8x256xf32> to vector<8x256xbf16>
    %c0_33 = arith.constant 0 : index
    %c0_34 = arith.constant 0 : index
    %92 = vector.load %arg7[%c0_33, %c0_34] : memref<256x128xbf16, #tpu.memory_space<vmem>>, vector<256x128xbf16>
    %cst_35 = arith.constant dense<0.000000e+00> : vector<8x128xf32>
    %93 = tpu.matmul %91, %92, %cst_35 {dimension_numbers = #tpu.dot_dimension_numbers<[1], [0], [0], [1], [0, 0, 1, 1], [], []>} : vector<8x256xbf16>, vector<256x128xbf16>, vector<8x128xf32> -> vector<8x128xf32>
    %c0_36 = arith.constant 0 : index
    %c0_37 = arith.constant 0 : index
    %94 = vector.load %arg8[%c0_36, %c0_37] : memref<1x128xf32, #tpu.memory_space<vmem>>, vector<1x128xf32>
    %95 = vector.broadcast %94 : vector<1x128xf32> to vector<8x128xf32>
    %96 = arith.addf %93, %95 : vector<8x128xf32>
    %c0_38 = arith.constant 0 : index
    %c0_39 = arith.constant 0 : index
    %97 = vector.load %arg9[%c0_38, %c0_39] : memref<8x128xf32, #tpu.memory_space<vmem>>, vector<8x128xf32>
    tpu.vector_store %arg9[%c0_38, %c0_39], %96 {strides = array<i32>} : memref<8x128xf32, #tpu.memory_space<vmem>>, vector<8x128xf32>,
    return
  }
  func.func @transform_0(%arg0: i32) -> (i32, i32) {
    %c0_i32 = arith.constant 0 : i32
    %c0_i32_0 = arith.constant 0 : i32
    return %arg0, %c0_i32 : i32, i32
  }
  func.func @transform_1(%arg0: i32) -> (i32, i32) {
    %c0_i32 = arith.constant 0 : i32
    %c0_i32_0 = arith.constant 0 : i32
    %c0_i32_1 = arith.constant 0 : i32
    return %c0_i32, %c0_i32_0 : i32, i32
  }
  func.func @transform_2(%arg0: i32) -> (i32, i32) {
    %c0_i32 = arith.constant 0 : i32
    %c0_i32_0 = arith.constant 0 : i32
    %c0_i32_1 = arith.constant 0 : i32
    return %c0_i32, %c0_i32_0 : i32, i32
  }
  func.func @transform_3(%arg0: i32) -> (i32, i32) {
    %c0_i32 = arith.constant 0 : i32
    %c0_i32_0 = arith.constant 0 : i32
    %c0_i32_1 = arith.constant 0 : i32
    return %c0_i32, %c0_i32_0 : i32, i32
  }
  func.func @transform_4(%arg0: i32) -> (i32, i32) {
    %c0_i32 = arith.constant 0 : i32
    %c0_i32_0 = arith.constant 0 : i32
    %c0_i32_1 = arith.constant 0 : i32
    return %c0_i32, %c0_i32_0 : i32, i32
  }
  func.func @transform_5(%arg0: i32) -> (i32, i32) {
    %c0_i32 = arith.constant 0 : i32
    %c0_i32_0 = arith.constant 0 : i32
    %c0_i32_1 = arith.constant 0 : i32
    return %c0_i32, %c0_i32_0 : i32, i32
  }
  func.func @transform_6(%arg0: i32) -> (i32, i32) {
    %c0_i32 = arith.constant 0 : i32
    %c0_i32_0 = arith.constant 0 : i32
    %c0_i32_1 = arith.constant 0 : i32
    return %c0_i32, %c0_i32_0 : i32, i32
  }
  func.func @transform_7(%arg0: i32) -> (i32, i32) {
    %c0_i32 = arith.constant 0 : i32
    %c0_i32_0 = arith.constant 0 : i32
    %c0_i32_1 = arith.constant 0 : i32
    return %c0_i32, %c0_i32_0 : i32, i32
  }
  func.func @transform_8(%arg0: i32) -> (i32, i32) {
    %c0_i32 = arith.constant 0 : i32
    %c0_i32_0 = arith.constant 0 : i32
    return %arg0, %c0_i32 : i32, i32
  }
}

</mosaic_0001>

<llo_original>
// kernel: dnn_classifier_forward.1
$region0: #{dnn_classifier_forward.1}
  #allocation0 [shape = 'u32[]', space=smem, size = 0x4, offset = 0x4, fixed_abs, tag = 'smem constant byte address 0x4 - core index']
  #allocation1 [shape = 'u32[144,128]{1,0:T(1,128)}', space=vmem, size = 0x12000, scoped, tag = 'internal scratch']
  #allocation2 [shape = 'bf16[8,256]{1,0:T(8,128)(2,1)}', space=vmem, size = 0x1000, scoped, tag = 'scratch operand']
  %s0 = inlined_call_operand.vmem [shape: s32[2,8], index: 0, kind: input, shape index: {}]
  %s1 = inlined_call_operand.vmem [shape: bf16[128,32], index: 1, kind: input, shape index: {}]
  %s2 = inlined_call_operand.vmem [shape: bf16[256,512], index: 2, kind: input, shape index: {}]
  %s3 = inlined_call_operand.vmem [shape: f32[1,512], index: 3, kind: input, shape index: {}]
  %s4 = inlined_call_operand.vmem [shape: bf16[512,256], index: 4, kind: input, shape index: {}]
  %s5 = inlined_call_operand.vmem [shape: f32[1,256], index: 5, kind: input, shape index: {}]
  %s6 = inlined_call_operand.vmem [shape: bf16[256,128], index: 6, kind: input, shape index: {}]
  %s7 = inlined_call_operand.vmem [shape: f32[1,128], index: 7, kind: input, shape index: {}]
  %s8 = inlined_call_operand.hbm [shape: f32[2,128], index: 8, kind: output, shape index: {}]
  %s9 = sld [smem:[#allocation0]]
  $region42: #{dnn_classifier_forward.1} parent=0
    _
  %s11 = ssub.s32 1, %s9
  %s12 = scalar_select 0, %s11, %s9
  $region1: #{dnn_classifier_forward.1} parent=0
    #allocation3 [shape = 'u8[4096]{0}', space=vmem, size = 0x1000, scoped, tag = 'output window, operand 0, single buffered']
    #allocation4 [shape = 's32[1]{0}', space=sflag, size = 0x4, scoped, tag = 'scoped memory for dnn_classifier_forward.1']
    %13 = vsyncpa [#allocation4], 0
    // Predicated region
    $region2: #{dnn_classifier_forward.1} parent=1 // pred_check
      _
    $region3: #{dnn_classifier_forward.1} parent=1 // pred_check_branch
      %15 = sbr.rel (0) target = $region5
    $region4: #{dnn_classifier_forward.1} parent=1 // pred_region
      _
    $region5: #{dnn_classifier_forward.1} parent=1 // pred_fallthru
      _
    // Predicated region
    $region6: #{dnn_classifier_forward.1} parent=1 // pred_check
      _
    $region7: #{dnn_classifier_forward.1} parent=1 // pred_check_branch
      %17 = sbr.rel (0) target = $region9
    $region8: #{dnn_classifier_forward.1} parent=1 // pred_region
      _
    $region9: #{dnn_classifier_forward.1} parent=1 // pred_fallthru
      _
    // Predicated region
    $region10: #{dnn_classifier_forward.1} parent=1 // pred_check
      _
    $region11: #{dnn_classifier_forward.1} parent=1 // pred_check_branch
      %19 = sbr.rel (0) target = $region13
    $region12: #{dnn_classifier_forward.1} parent=1 // pred_region
      _
    $region13: #{dnn_classifier_forward.1} parent=1 // pred_fallthru
      _
    // Predicated region
    $region14: #{dnn_classifier_forward.1} parent=1 // pred_check
      _
    $region15: #{dnn_classifier_forward.1} parent=1 // pred_check_branch
      %21 = sbr.rel (0) target = $region17
    $region16: #{dnn_classifier_forward.1} parent=1 // pred_region
      _
    $region17: #{dnn_classifier_forward.1} parent=1 // pred_fallthru
      _
    // Predicated region
    $region18: #{dnn_classifier_forward.1} parent=1 // pred_check
      _
    $region19: #{dnn_classifier_forward.1} parent=1 // pred_check_branch
      %23 = sbr.rel (0) target = $region21
    $region20: #{dnn_classifier_forward.1} parent=1 // pred_region
      _
    $region21: #{dnn_classifier_forward.1} parent=1 // pred_fallthru
      _
    // Predicated region
    $region22: #{dnn_classifier_forward.1} parent=1 // pred_check
      _
    $region23: #{dnn_classifier_forward.1} parent=1 // pred_check_branch
      %25 = sbr.rel (0) target = $region25
    $region24: #{dnn_classifier_forward.1} parent=1 // pred_region
      _
    $region25: #{dnn_classifier_forward.1} parent=1 // pred_fallthru
      _
    // Predicated region
    $region26: #{dnn_classifier_forward.1} parent=1 // pred_check
      _
    $region27: #{dnn_classifier_forward.1} parent=1 // pred_check_branch
      %27 = sbr.rel (0) target = $region29
    $region28: #{dnn_classifier_forward.1} parent=1 // pred_region
      _
    $region29: #{dnn_classifier_forward.1} parent=1 // pred_fallthru
      _
    // Predicated region
    $region30: #{dnn_classifier_forward.1} parent=1 // pred_check
      _
    $region31: #{dnn_classifier_forward.1} parent=1 // pred_check_branch
      %29 = sbr.rel (0) target = $region33
    $region32: #{dnn_classifier_forward.1} parent=1 // pred_region
      _
    $region33: #{dnn_classifier_forward.1} parent=1 // pred_fallthru
      _
    %v31 = vld [vmem:[%s0] sm:$0xff]
    %v32 = vld [vmem:[%s1] sm:$0xf]
    %v33 = vld [vmem:[%s1 + $0x4] sm:$0xf]
    %v34 = vld [vmem:[%s1 + $0x8] sm:$0xf]
    %v35 = vld [vmem:[%s1 + $0xc] sm:$0xf]
    %v36 = vld [vmem:[%s1 + $0x10] sm:$0xf]
    %v37 = vld [vmem:[%s1 + $0x14] sm:$0xf]
    %v38 = vld [vmem:[%s1 + $0x18] sm:$0xf]
    %v39 = vld [vmem:[%s1 + $0x1c] sm:$0xf]
    %v40 = vld [vmem:[%s1 + $0x20] sm:$0xf]
    %v41 = vld [vmem:[%s1 + $0x24] sm:$0xf]
    %v42 = vld [vmem:[%s1 + $0x28] sm:$0xf]
    %v43 = vld [vmem:[%s1 + $0x2c] sm:$0xf]
    %v44 = vld [vmem:[%s1 + $0x30] sm:$0xf]
    %v45 = vld [vmem:[%s1 + $0x34] sm:$0xf]
    %v46 = vld [vmem:[%s1 + $0x38] sm:$0xf]
    %v47 = vld [vmem:[%s1 + $0x3c] sm:$0xf]
    %v48 = vlaneseq
    %v49 = vand.u32 %v48, 127
    %50 = vset.pattern.permute.xlu0 0
    %51 = vperm.xlu0 %50, %v31
    %v52 = vpop.permute.xlu0 %51
    %vm53 = vcmp.eq.s32.totalorder %v52, %v49
    %v54 = vsel %vm53, 1, 0
    %v55 = vcvt.s32.f32 %v54
    %v56 = vpack.c.bf16 %v55, %v55
    %v73 = vunpack.c.l.b16 %v32
    %v74 = vunpack.c.l.b16 %v33
    %v75 = vunpack.c.l.b16 %v34
    %v76 = vunpack.c.l.b16 %v35
    %v77 = vunpack.c.l.b16 %v36
    %v78 = vunpack.c.l.b16 %v37
    %v79 = vunpack.c.l.b16 %v38
    %v80 = vunpack.c.l.b16 %v39
    %v81 = vunpack.c.l.b16 %v40
    %v82 = vunpack.c.l.b16 %v41
    %v83 = vunpack.c.l.b16 %v42
    %v84 = vunpack.c.l.b16 %v43
    %v85 = vunpack.c.l.b16 %v44
    %v86 = vunpack.c.l.b16 %v45
    %v87 = vunpack.c.l.b16 %v46
    %v88 = vunpack.c.l.b16 %v47
    %v89 = vpack.c.b16 %v74, %v73
    %v90 = vpack.c.b16 %v76, %v75
    %v91 = vpack.c.b16 %v78, %v77
    %v92 = vpack.c.b16 %v80, %v79
    %v93 = vpack.c.b16 %v82, %v81
    %v94 = vpack.c.b16 %v84, %v83
    %v95 = vpack.c.b16 %v86, %v85
    %v96 = vpack.c.b16 %v88, %v87
    %105 = vmatprep.subr.bf16.mxu0 0
    %106 = vmatpush1.bf16.msra.mxu0 %v89
    %107 = vmatprep.subr.bf16.mxu0 0
    %108 = vmatpush1.bf16.msra.mxu0 %v90
    %109 = vmatprep.subr.bf16.mxu0 0
    %110 = vmatpush1.bf16.msra.mxu0 %v91
    %111 = vmatprep.subr.bf16.mxu0 0
    %112 = vmatpush1.bf16.msra.mxu0 %v92
    %113 = vmatprep.subr.bf16.mxu0 0
    %114 = vmatpush1.bf16.msra.mxu0 %v93
    %115 = vmatprep.subr.bf16.mxu0 0
    %116 = vmatpush1.bf16.msra.mxu0 %v94
    %117 = vmatprep.subr.bf16.mxu0 0
    %118 = vmatpush1.bf16.msra.mxu0 %v95
    %119 = vmatprep.subr.bf16.mxu0 0
    %120 = vmatpush1.bf16.msra.mxu0 %v96
    %121 = vmatprep.subr.bf16.mxu0 0
    %122 = vmatpush1.bf16.msra.mxu0 0
    %123 = vmatprep.subr.bf16.mxu0 0
    %124 = vmatpush1.bf16.msra.mxu0 0
    %125 = vmatprep.subr.bf16.mxu0 0
    %126 = vmatpush1.bf16.msra.mxu0 0
    %127 = vmatprep.subr.bf16.mxu0 0
    %128 = vmatpush1.bf16.msra.mxu0 0
    %129 = vmatprep.subr.bf16.mxu0 0
    %130 = vmatpush1.bf16.msra.mxu0 0
    %131 = vmatprep.subr.bf16.mxu0 0
    %132 = vmatpush1.bf16.msra.mxu0 0
    %133 = vmatprep.subr.bf16.mxu0 0
    %134 = vmatpush1.bf16.msra.mxu0 0
    %135 = vmatprep.subr.bf16.mxu0 0
    %136 = vmatpush1.bf16.msra.mxu0 0
    %137 = vmatprep.mubr.bf16.mxu0 0
    %138 = vmatmul.mubr.bf16.gmra.mrb[0].mxu0 %v56
    %v139 = vpop.f32.mrb[0].mxu0
    %v140 = vadd.f32 0.0, %v139
    %v141 = vpop.f32.mrb[0].mxu0
    %v142 = vpop.f32.mrb[0].mxu0
    %v143 = vpop.f32.mrb[0].mxu0
    %144 = vdwg.mxu0
    %v145 = vpack.c.bf16 %v140, %v140
    %vm146 = vcmask 257024
    %147 = vst.msk [vmem:[#allocation2] sm:$0xf] %vm146, %v145
    %148 = vset.pattern.permute.xlu0 1
    %149 = vperm.xlu0 %148, %v31
    %v150 = vpop.permute.xlu0 %149
    %vm151 = vcmp.eq.s32.totalorder %v150, %v49
    %v152 = vsel %vm151, 1, 0
    %v153 = vcvt.s32.f32 %v152
    %v154 = vpack.c.bf16 %v153, %v153
    %155 = vmatprep.subr.bf16.mxu0 0
    %156 = vmatpush1.bf16.msra.mxu0 %v89
    %157 = vmatprep.subr.bf16.mxu0 0
    %158 = vmatpush1.bf16.msra.mxu0 %v90
    %159 = vmatprep.subr.bf16.mxu0 0
    %160 = vmatpush1.bf16.msra.mxu0 %v91
    %161 = vmatprep.subr.bf16.mxu0 0
    %162 = vmatpush1.bf16.msra.mxu0 %v92
    %163 = vmatprep.subr.bf16.mxu0 0
    %164 = vmatpush1.bf16.msra.mxu0 %v93
    %165 = vmatprep.subr.bf16.mxu0 0
    %166 = vmatpush1.bf16.msra.mxu0 %v94
    %167 = vmatprep.subr.bf16.mxu0 0
    %168 = vmatpush1.bf16.msra.mxu0 %v95
    %169 = vmatprep.subr.bf16.mxu0 0
    %170 = vmatpush1.bf16.msra.mxu0 %v96
    %171 = vmatprep.subr.bf16.mxu0 0
    %172 = vmatpush1.bf16.msra.mxu0 0
    %173 = vmatprep.subr.bf16.mxu0 0
    %174 = vmatpush1.bf16.msra.mxu0 0
    %175 = vmatprep.subr.bf16.mxu0 0
    %176 = vmatpush1.bf16.msra.mxu0 0
    %177 = vmatprep.subr.bf16.mxu0 0
    %178 = vmatpush1.bf16.msra.mxu0 0
    %179 = vmatprep.subr.bf16.mxu0 0
    %180 = vmatpush1.bf16.msra.mxu0 0
    %181 = vmatprep.subr.bf16.mxu0 0
    %182 = vmatpush1.bf16.msra.mxu0 0
    %183 = vmatprep.subr.bf16.mxu0 0
    %184 = vmatpush1.bf16.msra.mxu0 0
    %185 = vmatprep.subr.bf16.mxu0 0
    %186 = vmatpush1.bf16.msra.mxu0 0
    %187 = vmatprep.mubr.bf16.mxu0 0
    %188 = vmatmul.mubr.bf16.gmra.mrb[0].mxu0 %v154
    %v189 = vpop.f32.mrb[0].mxu0
    %v190 = vadd.f32 0.0, %v189
    %v191 = vpop.f32.mrb[0].mxu0
    %v192 = vpop.f32.mrb[0].mxu0
    %v193 = vpop.f32.mrb[0].mxu0
    %194 = vdwg.mxu0
    %v195 = vpack.c.bf16 %v190, %v190
    %v197 = vunpack.c.l.b16 %v195
    %v198 = vpack.c.b16 %v197, %v197
    %199 = vrot.lane.b32.xlu0 %v198, 32
    %v200 = vpop.permute.xlu0 %199
    %vm202 = vcmask 519424
    %203 = vst.msk [vmem:[#allocation2] sm:$0xf] %vm202, %v200
    %204 = vset.pattern.permute.xlu0 2
    %205 = vperm.xlu0 %204, %v31
    %v206 = vpop.permute.xlu0 %205
    %vm207 = vcmp.eq.s32.totalorder %v206, %v49
    %v208 = vsel %vm207, 1, 0
    %v209 = vcvt.s32.f32 %v208
    %v210 = vpack.c.bf16 %v209, %v209
    %211 = vmatprep.subr.bf16.mxu0 0
    %212 = vmatpush1.bf16.msra.mxu0 %v89
    %213 = vmatprep.subr.bf16.mxu0 0
    %214 = vmatpush1.bf16.msra.mxu0 %v90
    %215 = vmatprep.subr.bf16.mxu0 0
    %216 = vmatpush1.bf16.msra.mxu0 %v91
    %217 = vmatprep.subr.bf16.mxu0 0
    %218 = vmatpush1.bf16.msra.mxu0 %v92
    %219 = vmatprep.subr.bf16.mxu0 0
    %220 = vmatpush1.bf16.msra.mxu0 %v93
    %221 = vmatprep.subr.bf16.mxu0 0
    %222 = vmatpush1.bf16.msra.mxu0 %v94
    %223 = vmatprep.subr.bf16.mxu0 0
    %224 = vmatpush1.bf16.msra.mxu0 %v95
    %225 = vmatprep.subr.bf16.mxu0 0
    %226 = vmatpush1.bf16.msra.mxu0 %v96
    %227 = vmatprep.subr.bf16.mxu0 0
    %228 = vmatpush1.bf16.msra.mxu0 0
    %229 = vmatprep.subr.bf16.mxu0 0
    %230 = vmatpush1.bf16.msra.mxu0 0
    %231 = vmatprep.subr.bf16.mxu0 0
    %232 = vmatpush1.bf16.msra.mxu0 0
    %233 = vmatprep.subr.bf16.mxu0 0
    %234 = vmatpush1.bf16.msra.mxu0 0
    %235 = vmatprep.subr.bf16.mxu0 0
    %236 = vmatpush1.bf16.msra.mxu0 0
    %237 = vmatprep.subr.bf16.mxu0 0
    %238 = vmatpush1.bf16.msra.mxu0 0
    %239 = vmatprep.subr.bf16.mxu0 0
    %240 = vmatpush1.bf16.msra.mxu0 0
    %241 = vmatprep.subr.bf16.mxu0 0
    %242 = vmatpush1.bf16.msra.mxu0 0
    %243 = vmatprep.mubr.bf16.mxu0 0
    %244 = vmatmul.mubr.bf16.gmra.mrb[0].mxu0 %v210
    %v245 = vpop.f32.mrb[0].mxu0
    %v246 = vadd.f32 0.0, %v245
    %v247 = vpop.f32.mrb[0].mxu0
    %v248 = vpop.f32.mrb[0].mxu0
    %v249 = vpop.f32.mrb[0].mxu0
    %250 = vdwg.mxu0
    %v251 = vpack.c.bf16 %v246, %v246
    %v253 = vunpack.c.l.b16 %v251
    %v254 = vpack.c.b16 %v253, %v253
    %255 = vrot.lane.b32.xlu0 %v254, 64
    %v256 = vpop.permute.xlu0 %255
    %vm258 = vcmask 781824
    %259 = vst.msk [vmem:[#allocation2] sm:$0xf] %vm258, %v256
    %260 = vset.pattern.permute.xlu0 3
    %261 = vperm.xlu0 %260, %v31
    %v262 = vpop.permute.xlu0 %261
    %vm263 = vcmp.eq.s32.totalorder %v262, %v49
    %v264 = vsel %vm263, 1, 0
    %v265 = vcvt.s32.f32 %v264
    %v266 = vpack.c.bf16 %v265, %v265
    %267 = vmatprep.subr.bf16.mxu0 0
    %268 = vmatpush1.bf16.msra.mxu0 %v89
    %269 = vmatprep.subr.bf16.mxu0 0
    %270 = vmatpush1.bf16.msra.mxu0 %v90
    %271 = vmatprep.subr.bf16.mxu0 0
    %272 = vmatpush1.bf16.msra.mxu0 %v91
    %273 = vmatprep.subr.bf16.mxu0 0
    %274 = vmatpush1.bf16.msra.mxu0 %v92
    %275 = vmatprep.subr.bf16.mxu0 0
    %276 = vmatpush1.bf16.msra.mxu0 %v93
    %277 = vmatprep.subr.bf16.mxu0 0
    %278 = vmatpush1.bf16.msra.mxu0 %v94
    %279 = vmatprep.subr.bf16.mxu0 0
    %280 = vmatpush1.bf16.msra.mxu0 %v95
    %281 = vmatprep.subr.bf16.mxu0 0
    %282 = vmatpush1.bf16.msra.mxu0 %v96
    %283 = vmatprep.subr.bf16.mxu0 0
    %284 = vmatpush1.bf16.msra.mxu0 0
    %285 = vmatprep.subr.bf16.mxu0 0
    %286 = vmatpush1.bf16.msra.mxu0 0
    %287 = vmatprep.subr.bf16.mxu0 0
    %288 = vmatpush1.bf16.msra.mxu0 0
    %289 = vmatprep.subr.bf16.mxu0 0
    %290 = vmatpush1.bf16.msra.mxu0 0
    %291 = vmatprep.subr.bf16.mxu0 0
    %292 = vmatpush1.bf16.msra.mxu0 0
    %293 = vmatprep.subr.bf16.mxu0 0
    %294 = vmatpush1.bf16.msra.mxu0 0
    %295 = vmatprep.subr.bf16.mxu0 0
    %296 = vmatpush1.bf16.msra.mxu0 0
    %297 = vmatprep.subr.bf16.mxu0 0
    %298 = vmatpush1.bf16.msra.mxu0 0
    %299 = vmatprep.mubr.bf16.mxu0 0
    %300 = vmatmul.mubr.bf16.gmra.mrb[0].mxu0 %v266
    %v301 = vpop.f32.mrb[0].mxu0
    %v302 = vadd.f32 0.0, %v301
    %v303 = vpop.f32.mrb[0].mxu0
    %v304 = vpop.f32.mrb[0].mxu0
    %v305 = vpop.f32.mrb[0].mxu0
    %306 = vdwg.mxu0
    %v307 = vpack.c.bf16 %v302, %v302
    %v309 = vunpack.c.l.b16 %v307
    %v310 = vpack.c.b16 %v309, %v309
    %311 = vrot.lane.b32.xlu0 %v310, 96
    %v312 = vpop.permute.xlu0 %311
    %vm314 = vcmask 1044224
    %315 = vst.msk [vmem:[#allocation2] sm:$0xf] %vm314, %v312
    %316 = vset.pattern.permute.xlu0 4
    %317 = vperm.xlu0 %316, %v31
    %v318 = vpop.permute.xlu0 %317
    %vm319 = vcmp.eq.s32.totalorder %v318, %v49
    %v320 = vsel %vm319, 1, 0
    %v321 = vcvt.s32.f32 %v320
    %v322 = vpack.c.bf16 %v321, %v321
    %323 = vmatprep.subr.bf16.mxu0 0
    %324 = vmatpush1.bf16.msra.mxu0 %v89
    %325 = vmatprep.subr.bf16.mxu0 0
    %326 = vmatpush1.bf16.msra.mxu0 %v90
    %327 = vmatprep.subr.bf16.mxu0 0
    %328 = vmatpush1.bf16.msra.mxu0 %v91
    %329 = vmatprep.subr.bf16.mxu0 0
    %330 = vmatpush1.bf16.msra.mxu0 %v92
    %331 = vmatprep.subr.bf16.mxu0 0
    %332 = vmatpush1.bf16.msra.mxu0 %v93
    %333 = vmatprep.subr.bf16.mxu0 0
    %334 = vmatpush1.bf16.msra.mxu0 %v94
    %335 = vmatprep.subr.bf16.mxu0 0
    %336 = vmatpush1.bf16.msra.mxu0 %v95
    %337 = vmatprep.subr.bf16.mxu0 0
    %338 = vmatpush1.bf16.msra.mxu0 %v96
    %339 = vmatprep.subr.bf16.mxu0 0
    %340 = vmatpush1.bf16.msra.mxu0 0
    %341 = vmatprep.subr.bf16.mxu0 0
    %342 = vmatpush1.bf16.msra.mxu0 0
    %343 = vmatprep.subr.bf16.mxu0 0
    %344 = vmatpush1.bf16.msra.mxu0 0
    %345 = vmatprep.subr.bf16.mxu0 0
    %346 = vmatpush1.bf16.msra.mxu0 0
    %347 = vmatprep.subr.bf16.mxu0 0
    %348 = vmatpush1.bf16.msra.mxu0 0
    %349 = vmatprep.subr.bf16.mxu0 0
    %350 = vmatpush1.bf16.msra.mxu0 0
    %351 = vmatprep.subr.bf16.mxu0 0
    %352 = vmatpush1.bf16.msra.mxu0 0
    %353 = vmatprep.subr.bf16.mxu0 0
    %354 = vmatpush1.bf16.msra.mxu0 0
    %355 = vmatprep.mubr.bf16.mxu0 0
    %356 = vmatmul.mubr.bf16.gmra.mrb[0].mxu0 %v322
    %v357 = vpop.f32.mrb[0].mxu0
    %v358 = vadd.f32 0.0, %v357
    %v359 = vpop.f32.mrb[0].mxu0
    %v360 = vpop.f32.mrb[0].mxu0
    %v361 = vpop.f32.mrb[0].mxu0
    %362 = vdwg.mxu0
    %v363 = vpack.c.bf16 %v358, %v358
    %364 = vst.msk [vmem:[#allocation2 + $0x4] sm:$0xf] %vm146, %v363
    %365 = vset.pattern.permute.xlu0 5
    %366 = vperm.xlu0 %365, %v31
    %v367 = vpop.permute.xlu0 %366
    %vm368 = vcmp.eq.s32.totalorder %v367, %v49
    %v369 = vsel %vm368, 1, 0
    %v370 = vcvt.s32.f32 %v369
    %v371 = vpack.c.bf16 %v370, %v370
    %372 = vmatprep.subr.bf16.mxu0 0
    %373 = vmatpush1.bf16.msra.mxu0 %v89
    %374 = vmatprep.subr.bf16.mxu0 0
    %375 = vmatpush1.bf16.msra.mxu0 %v90
    %376 = vmatprep.subr.bf16.mxu0 0
    %377 = vmatpush1.bf16.msra.mxu0 %v91
    %378 = vmatprep.subr.bf16.mxu0 0
    %379 = vmatpush1.bf16.msra.mxu0 %v92
    %380 = vmatprep.subr.bf16.mxu0 0
    %381 = vmatpush1.bf16.msra.mxu0 %v93
    %382 = vmatprep.subr.bf16.mxu0 0
    %383 = vmatpush1.bf16.msra.mxu0 %v94
    %384 = vmatprep.subr.bf16.mxu0 0
    %385 = vmatpush1.bf16.msra.mxu0 %v95
    %386 = vmatprep.subr.bf16.mxu0 0
    %387 = vmatpush1.bf16.msra.mxu0 %v96
    %388 = vmatprep.subr.bf16.mxu0 0
    %389 = vmatpush1.bf16.msra.mxu0 0
    %390 = vmatprep.subr.bf16.mxu0 0
    %391 = vmatpush1.bf16.msra.mxu0 0
    %392 = vmatprep.subr.bf16.mxu0 0
    %393 = vmatpush1.bf16.msra.mxu0 0
    %394 = vmatprep.subr.bf16.mxu0 0
    %395 = vmatpush1.bf16.msra.mxu0 0
    %396 = vmatprep.subr.bf16.mxu0 0
    %397 = vmatpush1.bf16.msra.mxu0 0
    %398 = vmatprep.subr.bf16.mxu0 0
    %399 = vmatpush1.bf16.msra.mxu0 0
    %400 = vmatprep.subr.bf16.mxu0 0
    %401 = vmatpush1.bf16.msra.mxu0 0
    %402 = vmatprep.subr.bf16.mxu0 0
    %403 = vmatpush1.bf16.msra.mxu0 0
    %404 = vmatprep.mubr.bf16.mxu0 0
    %405 = vmatmul.mubr.bf16.gmra.mrb[0].mxu0 %v371
    %v406 = vpop.f32.mrb[0].mxu0
    %v407 = vadd.f32 0.0, %v406
    %v408 = vpop.f32.mrb[0].mxu0
    %v409 = vpop.f32.mrb[0].mxu0
    %v410 = vpop.f32.mrb[0].mxu0
    %411 = vdwg.mxu0
    %v412 = vpack.c.bf16 %v407, %v407
    %v414 = vunpack.c.l.b16 %v412
    %v415 = vpack.c.b16 %v414, %v414
    %416 = vrot.lane.b32.xlu0 %v415, 32
    %v417 = vpop.permute.xlu0 %416
    %419 = vst.msk [vmem:[#allocation2 + $0x4] sm:$0xf] %vm202, %v417
    %420 = vset.pattern.permute.xlu0 6
    %421 = vperm.xlu0 %420, %v31
    %v422 = vpop.permute.xlu0 %421
    %vm423 = vcmp.eq.s32.totalorder %v422, %v49
    %v424 = vsel %vm423, 1, 0
    %v425 = vcvt.s32.f32 %v424
    %v426 = vpack.c.bf16 %v425, %v425
    %427 = vmatprep.subr.bf16.mxu0 0
    %428 = vmatpush1.bf16.msra.mxu0 %v89
    %429 = vmatprep.subr.bf16.mxu0 0
    %430 = vmatpush1.bf16.msra.mxu0 %v90
    %431 = vmatprep.subr.bf16.mxu0 0
    %432 = vmatpush1.bf16.msra.mxu0 %v91
    %433 = vmatprep.subr.bf16.mxu0 0
    %434 = vmatpush1.bf16.msra.mxu0 %v92
    %435 = vmatprep.subr.bf16.mxu0 0
    %436 = vmatpush1.bf16.msra.mxu0 %v93
    %437 = vmatprep.subr.bf16.mxu0 0
    %438 = vmatpush1.bf16.msra.mxu0 %v94
    %439 = vmatprep.subr.bf16.mxu0 0
    %440 = vmatpush1.bf16.msra.mxu0 %v95
    %441 = vmatprep.subr.bf16.mxu0 0
    %442 = vmatpush1.bf16.msra.mxu0 %v96
    %443 = vmatprep.subr.bf16.mxu0 0
    %444 = vmatpush1.bf16.msra.mxu0 0
    %445 = vmatprep.subr.bf16.mxu0 0
    %446 = vmatpush1.bf16.msra.mxu0 0
    %447 = vmatprep.subr.bf16.mxu0 0
    %448 = vmatpush1.bf16.msra.mxu0 0
    %449 = vmatprep.subr.bf16.mxu0 0
    %450 = vmatpush1.bf16.msra.mxu0 0
    %451 = vmatprep.subr.bf16.mxu0 0
    %452 = vmatpush1.bf16.msra.mxu0 0
    %453 = vmatprep.subr.bf16.mxu0 0
    %454 = vmatpush1.bf16.msra.mxu0 0
    %455 = vmatprep.subr.bf16.mxu0 0
    %456 = vmatpush1.bf16.msra.mxu0 0
    %457 = vmatprep.subr.bf16.mxu0 0
    %458 = vmatpush1.bf16.msra.mxu0 0
    %459 = vmatprep.mubr.bf16.mxu0 0
    %460 = vmatmul.mubr.bf16.gmra.mrb[0].mxu0 %v426
    %v461 = vpop.f32.mrb[0].mxu0
    %v462 = vadd.f32 0.0, %v461
    %v463 = vpop.f32.mrb[0].mxu0
    %v464 = vpop.f32.mrb[0].mxu0
    %v465 = vpop.f32.mrb[0].mxu0
    %466 = vdwg.mxu0
    %v467 = vpack.c.bf16 %v462, %v462
    %v469 = vunpack.c.l.b16 %v467
    %v470 = vpack.c.b16 %v469, %v469
    %471 = vrot.lane.b32.xlu0 %v470, 64
    %v472 = vpop.permute.xlu0 %471
    %474 = vst.msk [vmem:[#allocation2 + $0x4] sm:$0xf] %vm258, %v472
    %475 = vset.pattern.permute.xlu0 7
    %476 = vperm.xlu0 %475, %v31
    %v477 = vpop.permute.xlu0 %476
    %vm478 = vcmp.eq.s32.totalorder %v477, %v49
    %v479 = vsel %vm478, 1, 0
    %v480 = vcvt.s32.f32 %v479
    %v481 = vpack.c.bf16 %v480, %v480
    %482 = vmatprep.subr.bf16.mxu0 0
    %483 = vmatpush1.bf16.msra.mxu0 %v89
    %484 = vmatprep.subr.bf16.mxu0 0
    %485 = vmatpush1.bf16.msra.mxu0 %v90
    %486 = vmatprep.subr.bf16.mxu0 0
    %487 = vmatpush1.bf16.msra.mxu0 %v91
    %488 = vmatprep.subr.bf16.mxu0 0
    %489 = vmatpush1.bf16.msra.mxu0 %v92
    %490 = vmatprep.subr.bf16.mxu0 0
    %491 = vmatpush1.bf16.msra.mxu0 %v93
    %492 = vmatprep.subr.bf16.mxu0 0
    %493 = vmatpush1.bf16.msra.mxu0 %v94
    %494 = vmatprep.subr.bf16.mxu0 0
    %495 = vmatpush1.bf16.msra.mxu0 %v95
    %496 = vmatprep.subr.bf16.mxu0 0
    %497 = vmatpush1.bf16.msra.mxu0 %v96
    %498 = vmatprep.subr.bf16.mxu0 0
    %499 = vmatpush1.bf16.msra.mxu0 0
    %500 = vmatprep.subr.bf16.mxu0 0
    %501 = vmatpush1.bf16.msra.mxu0 0
    %502 = vmatprep.subr.bf16.mxu0 0
    %503 = vmatpush1.bf16.msra.mxu0 0
    %504 = vmatprep.subr.bf16.mxu0 0
    %505 = vmatpush1.bf16.msra.mxu0 0
    %506 = vmatprep.subr.bf16.mxu0 0
    %507 = vmatpush1.bf16.msra.mxu0 0
    %508 = vmatprep.subr.bf16.mxu0 0
    %509 = vmatpush1.bf16.msra.mxu0 0
    %510 = vmatprep.subr.bf16.mxu0 0
    %511 = vmatpush1.bf16.msra.mxu0 0
    %512 = vmatprep.subr.bf16.mxu0 0
    %513 = vmatpush1.bf16.msra.mxu0 0
    %514 = vmatprep.mubr.bf16.mxu0 0
    %515 = vmatmul.mubr.bf16.gmra.mrb[0].mxu0 %v481
    %v516 = vpop.f32.mrb[0].mxu0
    %v517 = vadd.f32 0.0, %v516
    %v518 = vpop.f32.mrb[0].mxu0
    %v519 = vpop.f32.mrb[0].mxu0
    %v520 = vpop.f32.mrb[0].mxu0
    %521 = vdwg.mxu0
    %v522 = vpack.c.bf16 %v517, %v517
    %v524 = vunpack.c.l.b16 %v522
    %v525 = vpack.c.b16 %v524, %v524
    %526 = vrot.lane.b32.xlu0 %v525, 96
    %v527 = vpop.permute.xlu0 %526
    %529 = vst.msk [vmem:[#allocation2 + $0x4] sm:$0xf] %vm314, %v527
    %v530 = vld [vmem:[#allocation2] sm:$0xff]
    %v531 = vld [vmem:[%s2] sm:$0xff]
    %v532 = vld [vmem:[%s2 + $0x8] sm:$0xff]
    %v533 = vld [vmem:[%s2 + $0x10] sm:$0xff]
    %v534 = vld [vmem:[%s2 + $0x18] sm:$0xff]
    %v535 = vld [vmem:[%s2 + $0x20] sm:$0xff]
    %v536 = vld [vmem:[%s2 + $0x28] sm:$0xff]
    %v537 = vld [vmem:[%s2 + $0x30] sm:$0xff]
    %v538 = vld [vmem:[%s2 + $0x38] sm:$0xff]
    %v539 = vld [vmem:[%s2 + $0x40] sm:$0xff]
    %v540 = vld [vmem:[%s2 + $0x48] sm:$0xff]
    %v541 = vld [vmem:[%s2 + $0x50] sm:$0xff]
    %v542 = vld [vmem:[%s2 + $0x58] sm:$0xff]
    %v543 = vld [vmem:[%s2 + $0x60] sm:$0xff]
    %v544 = vld [vmem:[%s2 + $0x68] sm:$0xff]
    %v545 = vld [vmem:[%s2 + $0x70] sm:$0xff]
    %v546 = vld [vmem:[%s2 + $0x78] sm:$0xff]
    %v547 = vld [vmem:[%s2 + $0x80] sm:$0xff]
    %v548 = vld [vmem:[%s2 + $0x88] sm:$0xff]
    %v549 = vld [vmem:[%s2 + $0x90] sm:$0xff]
    %v550 = vld [vmem:[%s2 + $0x98] sm:$0xff]
    %v551 = vld [vmem:[%s2 + $0xa0] sm:$0xff]
    %v552 = vld [vmem:[%s2 + $0xa8] sm:$0xff]
    %v553 = vld [vmem:[%s2 + $0xb0] sm:$0xff]
    %v554 = vld [vmem:[%s2 + $0xb8] sm:$0xff]
    %v555 = vld [vmem:[%s2 + $0xc0] sm:$0xff]
    %v556 = vld [vmem:[%s2 + $0xc8] sm:$0xff]
    %v557 = vld [vmem:[%s2 + $0xd0] sm:$0xff]
    %v558 = vld [vmem:[%s2 + $0xd8] sm:$0xff]
    %v559 = vld [vmem:[%s2 + $0xe0] sm:$0xff]
    %v560 = vld [vmem:[%s2 + $0xe8] sm:$0xff]
    %v561 = vld [vmem:[%s2 + $0xf0] sm:$0xff]
    %v562 = vld [vmem:[%s2 + $0xf8] sm:$0xff]
    %v563 = vld [vmem:[%s2 + $0x100] sm:$0xff]
    %v564 = vld [vmem:[%s2 + $0x108] sm:$0xff]
    %v565 = vld [vmem:[%s2 + $0x110] sm:$0xff]
    %v566 = vld [vmem:[%s2 + $0x118] sm:$0xff]
    %v567 = vld [vmem:[%s2 + $0x120] sm:$0xff]
    %v568 = vld [vmem:[%s2 + $0x128] sm:$0xff]
    %v569 = vld [vmem:[%s2 + $0x130] sm:$0xff]
    %v570 = vld [vmem:[%s2 + $0x138] sm:$0xff]
    %v571 = vld [vmem:[%s2 + $0x140] sm:$0xff]
    %v572 = vld [vmem:[%s2 + $0x148] sm:$0xff]
    %v573 = vld [vmem:[%s2 + $0x150] sm:$0xff]
    %v574 = vld [vmem:[%s2 + $0x158] sm:$0xff]
    %v575 = vld [vmem:[%s2 + $0x160] sm:$0xff]
    %v576 = vld [vmem:[%s2 + $0x168] sm:$0xff]
    %v577 = vld [vmem:[%s2 + $0x170] sm:$0xff]
    %v578 = vld [vmem:[%s2 + $0x178] sm:$0xff]
    %v579 = vld [vmem:[%s2 + $0x180] sm:$0xff]
    %v580 = vld [vmem:[%s2 + $0x188] sm:$0xff]
    %v581 = vld [vmem:[%s2 + $0x190] sm:$0xff]
    %v582 = vld [vmem:[%s2 + $0x198] sm:$0xff]
    %v583 = vld [vmem:[%s2 + $0x1a0] sm:$0xff]
    %v584 = vld [vmem:[%s2 + $0x1a8] sm:$0xff]
    %v585 = vld [vmem:[%s2 + $0x1b0] sm:$0xff]
    %v586 = vld [vmem:[%s2 + $0x1b8] sm:$0xff]
    %v587 = vld [vmem:[%s2 + $0x1c0] sm:$0xff]
    %v588 = vld [vmem:[%s2 + $0x1c8] sm:$0xff]
    %v589 = vld [vmem:[%s2 + $0x1d0] sm:$0xff]
    %v590 = vld [vmem:[%s2 + $0x1d8] sm:$0xff]
    %v591 = vld [vmem:[%s2 + $0x1e0] sm:$0xff]
    %v592 = vld [vmem:[%s2 + $0x1e8] sm:$0xff]
    %v593 = vld [vmem:[%s2 + $0x1f0] sm:$0xff]
    %v594 = vld [vmem:[%s2 + $0x1f8] sm:$0xff]
    %v595 = vld [vmem:[%s3] sm:$0xf]
    %v597 = vlaneseq
    %v598 = vshrl.u32 %v597, 7
    %v599 = vsub.s32 0, %v598
    %v600 = vrot.slane %v595, %v599
    %v601 = vlaneseq
    %v602 = vshrl.u32 %v601, 7
    %v603 = vsub.s32 1, %v602
    %v604 = vrot.slane %v595, %v603
    %v605 = vlaneseq
    %v606 = vshrl.u32 %v605, 7
    %v607 = vsub.s32 2, %v606
    %v608 = vrot.slane %v595, %v607
    %v609 = vlaneseq
    %v610 = vshrl.u32 %v609, 7
    %v611 = vsub.s32 3, %v610
    %v612 = vrot.slane %v595, %v611
    %v618 = vunpack.c.l.b16 %v530
    %v619 = vunpack.c.h.b16 %v530
    %v620 = vpack.c.b16 %v618, %v618
    %v621 = vpack.c.b16 %v619, %v619
    %v688 = vunpack.c.l.b16 %v531
    %v689 = vunpack.c.h.b16 %v531
    %v690 = vunpack.c.l.b16 %v532
    %v691 = vunpack.c.h.b16 %v532
    %v692 = vunpack.c.l.b16 %v533
    %v693 = vunpack.c.h.b16 %v533
    %v694 = vunpack.c.l.b16 %v534
    %v695 = vunpack.c.h.b16 %v534
    %v696 = vunpack.c.l.b16 %v535
    %v697 = vunpack.c.h.b16 %v535
    %v698 = vunpack.c.l.b16 %v536
    %v699 = vunpack.c.h.b16 %v536
    %v700 = vunpack.c.l.b16 %v537
    %v701 = vunpack.c.h.b16 %v537
    %v702 = vunpack.c.l.b16 %v538
    %v703 = vunpack.c.h.b16 %v538
    %v704 = vunpack.c.l.b16 %v539
    %v705 = vunpack.c.h.b16 %v539
    %v706 = vunpack.c.l.b16 %v540
    %v707 = vunpack.c.h.b16 %v540
    %v708 = vunpack.c.l.b16 %v541
    %v709 = vunpack.c.h.b16 %v541
    %v710 = vunpack.c.l.b16 %v542
    %v711 = vunpack.c.h.b16 %v542
    %v712 = vunpack.c.l.b16 %v543
    %v713 = vunpack.c.h.b16 %v543
    %v714 = vunpack.c.l.b16 %v544
    %v715 = vunpack.c.h.b16 %v544
    %v716 = vunpack.c.l.b16 %v545
    %v717 = vunpack.c.h.b16 %v545
    %v718 = vunpack.c.l.b16 %v546
    %v719 = vunpack.c.h.b16 %v546
    %v720 = vunpack.c.l.b16 %v547
    %v721 = vunpack.c.h.b16 %v547
    %v722 = vunpack.c.l.b16 %v548
    %v723 = vunpack.c.h.b16 %v548
    %v724 = vunpack.c.l.b16 %v549
    %v725 = vunpack.c.h.b16 %v549
    %v726 = vunpack.c.l.b16 %v550
    %v727 = vunpack.c.h.b16 %v550
    %v728 = vunpack.c.l.b16 %v551
    %v729 = vunpack.c.h.b16 %v551
    %v730 = vunpack.c.l.b16 %v552
    %v731 = vunpack.c.h.b16 %v552
    %v732 = vunpack.c.l.b16 %v553
    %v733 = vunpack.c.h.b16 %v553
    %v734 = vunpack.c.l.b16 %v554
    %v735 = vunpack.c.h.b16 %v554
    %v736 = vunpack.c.l.b16 %v555
    %v737 = vunpack.c.h.b16 %v555
    %v738 = vunpack.c.l.b16 %v556
    %v739 = vunpack.c.h.b16 %v556
    %v740 = vunpack.c.l.b16 %v557
    %v741 = vunpack.c.h.b16 %v557
    %v742 = vunpack.c.l.b16 %v558
    %v743 = vunpack.c.h.b16 %v558
    %v744 = vunpack.c.l.b16 %v559
    %v745 = vunpack.c.h.b16 %v559
    %v746 = vunpack.c.l.b16 %v560
    %v747 = vunpack.c.h.b16 %v560
    %v748 = vunpack.c.l.b16 %v561
    %v749 = vunpack.c.h.b16 %v561
    %v750 = vunpack.c.l.b16 %v562
    %v751 = vunpack.c.h.b16 %v562
    %v752 = vunpack.c.l.b16 %v563
    %v753 = vunpack.c.h.b16 %v563
    %v754 = vunpack.c.l.b16 %v564
    %v755 = vunpack.c.h.b16 %v564
    %v756 = vunpack.c.l.b16 %v565
    %v757 = vunpack.c.h.b16 %v565
    %v758 = vunpack.c.l.b16 %v566
    %v759 = vunpack.c.h.b16 %v566
    %v760 = vunpack.c.l.b16 %v567
    %v761 = vunpack.c.h.b16 %v567
    %v762 = vunpack.c.l.b16 %v568
    %v763 = vunpack.c.h.b16 %v568
    %v764 = vunpack.c.l.b16 %v569
    %v765 = vunpack.c.h.b16 %v569
    %v766 = vunpack.c.l.b16 %v570
    %v767 = vunpack.c.h.b16 %v570
    %v768 = vunpack.c.l.b16 %v571
    %v769 = vunpack.c.h.b16 %v571
    %v770 = vunpack.c.l.b16 %v572
    %v771 = vunpack.c.h.b16 %v572
    %v772 = vunpack.c.l.b16 %v573
    %v773 = vunpack.c.h.b16 %v573
    %v774 = vunpack.c.l.b16 %v574
    %v775 = vunpack.c.h.b16 %v574
    %v776 = vunpack.c.l.b16 %v575
    %v777 = vunpack.c.h.b16 %v575
    %v778 = vunpack.c.l.b16 %v576
    %v779 = vunpack.c.h.b16 %v576
    %v780 = vunpack.c.l.b16 %v577
    %v781 = vunpack.c.h.b16 %v577
    %v782 = vunpack.c.l.b16 %v578
    %v783 = vunpack.c.h.b16 %v578
    %v784 = vunpack.c.l.b16 %v579
    %v785 = vunpack.c.h.b16 %v579
    %v786 = vunpack.c.l.b16 %v580
    %v787 = vunpack.c.h.b16 %v580
    %v788 = vunpack.c.l.b16 %v581
    %v789 = vunpack.c.h.b16 %v581
    %v790 = vunpack.c.l.b16 %v582
    %v791 = vunpack.c.h.b16 %v582
    %v792 = vunpack.c.l.b16 %v583
    %v793 = vunpack.c.h.b16 %v583
    %v794 = vunpack.c.l.b16 %v584
    %v795 = vunpack.c.h.b16 %v584
    %v796 = vunpack.c.l.b16 %v585
    %v797 = vunpack.c.h.b16 %v585
    %v798 = vunpack.c.l.b16 %v586
    %v799 = vunpack.c.h.b16 %v586
    %v800 = vunpack.c.l.b16 %v587
    %v801 = vunpack.c.h.b16 %v587
    %v802 = vunpack.c.l.b16 %v588
    %v803 = vunpack.c.h.b16 %v588
    %v804 = vunpack.c.l.b16 %v589
    %v805 = vunpack.c.h.b16 %v589
    %v806 = vunpack.c.l.b16 %v590
    %v807 = vunpack.c.h.b16 %v590
    %v808 = vunpack.c.l.b16 %v591
    %v809 = vunpack.c.h.b16 %v591
    %v810 = vunpack.c.l.b16 %v592
    %v811 = vunpack.c.h.b16 %v592
    %v812 = vunpack.c.l.b16 %v593
    %v813 = vunpack.c.h.b16 %v593
    %v814 = vunpack.c.l.b16 %v594
    %v815 = vunpack.c.h.b16 %v594
    %v816 = vpack.c.b16 %v692, %v688
    %v817 = vpack.c.b16 %v693, %v689
    %v818 = vpack.c.b16 %v694, %v690
    %v819 = vpack.c.b16 %v695, %v691
    %v820 = vpack.c.b16 %v700, %v696
    %v821 = vpack.c.b16 %v701, %v697
    %v822 = vpack.c.b16 %v702, %v698
    %v823 = vpack.c.b16 %v703, %v699
    %v824 = vpack.c.b16 %v708, %v704
    %v825 = vpack.c.b16 %v709, %v705
    %v826 = vpack.c.b16 %v710, %v706
    %v827 = vpack.c.b16 %v711, %v707
    %v828 = vpack.c.b16 %v716, %v712
    %v829 = vpack.c.b16 %v717, %v713
    %v830 = vpack.c.b16 %v718, %v714
    %v831 = vpack.c.b16 %v719, %v715
    %v832 = vpack.c.b16 %v724, %v720
    %v833 = vpack.c.b16 %v725, %v721
    %v834 = vpack.c.b16 %v726, %v722
    %v835 = vpack.c.b16 %v727, %v723
    %v836 = vpack.c.b16 %v732, %v728
    %v837 = vpack.c.b16 %v733, %v729
    %v838 = vpack.c.b16 %v734, %v730
    %v839 = vpack.c.b16 %v735, %v731
    %v840 = vpack.c.b16 %v740, %v736
    %v841 = vpack.c.b16 %v741, %v737
    %v842 = vpack.c.b16 %v742, %v738
    %v843 = vpack.c.b16 %v743, %v739
    %v844 = vpack.c.b16 %v748, %v744
    %v845 = vpack.c.b16 %v749, %v745
    %v846 = vpack.c.b16 %v750, %v746
    %v847 = vpack.c.b16 %v751, %v747
    %v848 = vpack.c.b16 %v756, %v752
    %v849 = vpack.c.b16 %v757, %v753
    %v850 = vpack.c.b16 %v758, %v754
    %v851 = vpack.c.b16 %v759, %v755
    %v852 = vpack.c.b16 %v764, %v760
    %v853 = vpack.c.b16 %v765, %v761
    %v854 = vpack.c.b16 %v766, %v762
    %v855 = vpack.c.b16 %v767, %v763
    %v856 = vpack.c.b16 %v772, %v768
    %v857 = vpack.c.b16 %v773, %v769
    %v858 = vpack.c.b16 %v774, %v770
    %v859 = vpack.c.b16 %v775, %v771
    %v860 = vpack.c.b16 %v780, %v776
    %v861 = vpack.c.b16 %v781, %v777
    %v862 = vpack.c.b16 %v782, %v778
    %v863 = vpack.c.b16 %v783, %v779
    %v864 = vpack.c.b16 %v788, %v784
    %v865 = vpack.c.b16 %v789, %v785
    %v866 = vpack.c.b16 %v790, %v786
    %v867 = vpack.c.b16 %v791, %v787
    %v868 = vpack.c.b16 %v796, %v792
    %v869 = vpack.c.b16 %v797, %v793
    %v870 = vpack.c.b16 %v798, %v794
    %v871 = vpack.c.b16 %v799, %v795
    %v872 = vpack.c.b16 %v804, %v800
    %v873 = vpack.c.b16 %v805, %v801
    %v874 = vpack.c.b16 %v806, %v802
    %v875 = vpack.c.b16 %v807, %v803
    %v876 = vpack.c.b16 %v812, %v808
    %v877 = vpack.c.b16 %v813, %v809
    %v878 = vpack.c.b16 %v814, %v810
    %v879 = vpack.c.b16 %v815, %v811
    %944 = vmatprep.subr.bf16.mxu0 %v817
    %945 = vmatpush1.bf16.msra.mxu0 %v816
    %946 = vmatprep.subr.bf16.mxu0 %v821
    %947 = vmatpush1.bf16.msra.mxu0 %v820
    %948 = vmatprep.subr.bf16.mxu0 %v825
    %949 = vmatpush1.bf16.msra.mxu0 %v824
    %950 = vmatprep.subr.bf16.mxu0 %v829
    %951 = vmatpush1.bf16.msra.mxu0 %v828
    %952 = vmatprep.subr.bf16.mxu0 %v833
    %953 = vmatpush1.bf16.msra.mxu0 %v832
    %954 = vmatprep.subr.bf16.mxu0 %v837
    %955 = vmatpush1.bf16.msra.mxu0 %v836
    %956 = vmatprep.subr.bf16.mxu0 %v841
    %957 = vmatpush1.bf16.msra.mxu0 %v840
    %958 = vmatprep.subr.bf16.mxu0 %v845
    %959 = vmatpush1.bf16.msra.mxu0 %v844
    %960 = vmatprep.subr.bf16.mxu0 %v849
    %961 = vmatpush1.bf16.msra.mxu0 %v848
    %962 = vmatprep.subr.bf16.mxu0 %v853
    %963 = vmatpush1.bf16.msra.mxu0 %v852
    %964 = vmatprep.subr.bf16.mxu0 %v857
    %965 = vmatpush1.bf16.msra.mxu0 %v856
    %966 = vmatprep.subr.bf16.mxu0 %v861
    %967 = vmatpush1.bf16.msra.mxu0 %v860
    %968 = vmatprep.subr.bf16.mxu0 %v865
    %969 = vmatpush1.bf16.msra.mxu0 %v864
    %970 = vmatprep.subr.bf16.mxu0 %v869
    %971 = vmatpush1.bf16.msra.mxu0 %v868
    %972 = vmatprep.subr.bf16.mxu0 %v873
    %973 = vmatpush1.bf16.msra.mxu0 %v872
    %974 = vmatprep.subr.bf16.mxu0 %v877
    %975 = vmatpush1.bf16.msra.mxu0 %v876
    %976 = vmatprep.mubr.bf16.mxu0 %v621
    %977 = vmatmul.mubr.bf16.gmra.mrb[0].mxu0 %v620
    %v978 = vpop.f32.mrb[0].mxu0
    %v979 = vadd.f32 %v600, %v978
    %v980 = vpop.f32.mrb[0].mxu0
    %v981 = vadd.f32 %v604, %v980
    %v982 = vpop.f32.mrb[0].mxu0
    %v983 = vpop.f32.mrb[0].mxu0
    %984 = vdwg.mxu0
    %985 = vmatprep.subr.bf16.mxu0 %v819
    %986 = vmatpush1.bf16.msra.mxu0 %v818
    %987 = vmatprep.subr.bf16.mxu0 %v823
    %988 = vmatpush1.bf16.msra.mxu0 %v822
    %989 = vmatprep.subr.bf16.mxu0 %v827
    %990 = vmatpush1.bf16.msra.mxu0 %v826
    %991 = vmatprep.subr.bf16.mxu0 %v831
    %992 = vmatpush1.bf16.msra.mxu0 %v830
    %993 = vmatprep.subr.bf16.mxu0 %v835
    %994 = vmatpush1.bf16.msra.mxu0 %v834
    %995 = vmatprep.subr.bf16.mxu0 %v839
    %996 = vmatpush1.bf16.msra.mxu0 %v838
    %997 = vmatprep.subr.bf16.mxu0 %v843
    %998 = vmatpush1.bf16.msra.mxu0 %v842
    %999 = vmatprep.subr.bf16.mxu0 %v847
    %1000 = vmatpush1.bf16.msra.mxu0 %v846
    %1001 = vmatprep.subr.bf16.mxu0 %v851
    %1002 = vmatpush1.bf16.msra.mxu0 %v850
    %1003 = vmatprep.subr.bf16.mxu0 %v855
    %1004 = vmatpush1.bf16.msra.mxu0 %v854
    %1005 = vmatprep.subr.bf16.mxu0 %v859
    %1006 = vmatpush1.bf16.msra.mxu0 %v858
    %1007 = vmatprep.subr.bf16.mxu0 %v863
    %1008 = vmatpush1.bf16.msra.mxu0 %v862
    %1009 = vmatprep.subr.bf16.mxu0 %v867
    %1010 = vmatpush1.bf16.msra.mxu0 %v866
    %1011 = vmatprep.subr.bf16.mxu0 %v871
    %1012 = vmatpush1.bf16.msra.mxu0 %v870
    %1013 = vmatprep.subr.bf16.mxu0 %v875
    %1014 = vmatpush1.bf16.msra.mxu0 %v874
    %1015 = vmatprep.subr.bf16.mxu0 %v879
    %1016 = vmatpush1.bf16.msra.mxu0 %v878
    %1017 = vmatprep.mubr.bf16.mxu0 %v621
    %1018 = vmatmul.mubr.bf16.gmra.mrb[0].mxu0 %v620
    %v1019 = vpop.f32.mrb[0].mxu0
    %v1020 = vadd.f32 %v608, %v1019
    %v1021 = vpop.f32.mrb[0].mxu0
    %v1022 = vadd.f32 %v612, %v1021
    %v1023 = vpop.f32.mrb[0].mxu0
    %v1024 = vpop.f32.mrb[0].mxu0
    %1025 = vdwg.mxu0
    %v1026 = vmax.f32 %v979, 0.0
    %v1027 = vmax.f32 %v981, 0.0
    %v1028 = vmax.f32 %v1020, 0.0
    %v1029 = vmax.f32 %v1022, 0.0
    %v1030 = vpack.c.bf16 %v1026, %v1026
    %v1031 = vpack.c.bf16 %v1027, %v1027
    %v1032 = vpack.c.bf16 %v1028, %v1028
    %v1033 = vpack.c.bf16 %v1029, %v1029
    %v1034 = vld [vmem:[%s4] sm:$0xff]
    %v1035 = vld [vmem:[%s4 + $0x8] sm:$0xff]
    %v1036 = vld [vmem:[%s4 + $0x10] sm:$0xff]
    %v1037 = vld [vmem:[%s4 + $0x18] sm:$0xff]
    %v1038 = vld [vmem:[%s4 + $0x20] sm:$0xff]
    %v1039 = vld [vmem:[%s4 + $0x28] sm:$0xff]
    %v1040 = vld [vmem:[%s4 + $0x30] sm:$0xff]
    %v1041 = vld [vmem:[%s4 + $0x38] sm:$0xff]
    %v1042 = vld [vmem:[%s4 + $0x40] sm:$0xff]
    %v1043 = vld [vmem:[%s4 + $0x48] sm:$0xff]
    %v1044 = vld [vmem:[%s4 + $0x50] sm:$0xff]
    %v1045 = vld [vmem:[%s4 + $0x58] sm:$0xff]
    %v1046 = vld [vmem:[%s4 + $0x60] sm:$0xff]
    %v1047 = vld [vmem:[%s4 + $0x68] sm:$0xff]
    %v1048 = vld [vmem:[%s4 + $0x70] sm:$0xff]
    %v1049 = vld [vmem:[%s4 + $0x78] sm:$0xff]
    %v1050 = vld [vmem:[%s4 + $0x80] sm:$0xff]
    %v1051 = vld [vmem:[%s4 + $0x88] sm:$0xff]
    %v1052 = vld [vmem:[%s4 + $0x90] sm:$0xff]
    %v1053 = vld [vmem:[%s4 + $0x98] sm:$0xff]
    %v1054 = vld [vmem:[%s4 + $0xa0] sm:$0xff]
    %v1055 = vld [vmem:[%s4 + $0xa8] sm:$0xff]
    %v1056 = vld [vmem:[%s4 + $0xb0] sm:$0xff]
    %v1057 = vld [vmem:[%s4 + $0xb8] sm:$0xff]
    %v1058 = vld [vmem:[%s4 + $0xc0] sm:$0xff]
    %v1059 = vld [vmem:[%s4 + $0xc8] sm:$0xff]
    %v1060 = vld [vmem:[%s4 + $0xd0] sm:$0xff]
    %v1061 = vld [vmem:[%s4 + $0xd8] sm:$0xff]
    %v1062 = vld [vmem:[%s4 + $0xe0] sm:$0xff]
    %v1063 = vld [vmem:[%s4 + $0xe8] sm:$0xff]
    %v1064 = vld [vmem:[%s4 + $0xf0] sm:$0xff]
    %v1065 = vld [vmem:[%s4 + $0xf8] sm:$0xff]
    %v1066 = vld [vmem:[%s4 + $0x100] sm:$0xff]
    %v1067 = vld [vmem:[%s4 + $0x108] sm:$0xff]
    %v1068 = vld [vmem:[%s4 + $0x110] sm:$0xff]
    %v1069 = vld [vmem:[%s4 + $0x118] sm:$0xff]
    %v1070 = vld [vmem:[%s4 + $0x120] sm:$0xff]
    %v1071 = vld [vmem:[%s4 + $0x128] sm:$0xff]
    %v1072 = vld [vmem:[%s4 + $0x130] sm:$0xff]
    %v1073 = vld [vmem:[%s4 + $0x138] sm:$0xff]
    %v1074 = vld [vmem:[%s4 + $0x140] sm:$0xff]
    %v1075 = vld [vmem:[%s4 + $0x148] sm:$0xff]
    %v1076 = vld [vmem:[%s4 + $0x150] sm:$0xff]
    %v1077 = vld [vmem:[%s4 + $0x158] sm:$0xff]
    %v1078 = vld [vmem:[%s4 + $0x160] sm:$0xff]
    %v1079 = vld [vmem:[%s4 + $0x168] sm:$0xff]
    %v1080 = vld [vmem:[%s4 + $0x170] sm:$0xff]
    %v1081 = vld [vmem:[%s4 + $0x178] sm:$0xff]
    %v1082 = vld [vmem:[%s4 + $0x180] sm:$0xff]
    %v1083 = vld [vmem:[%s4 + $0x188] sm:$0xff]
    %v1084 = vld [vmem:[%s4 + $0x190] sm:$0xff]
    %v1085 = vld [vmem:[%s4 + $0x198] sm:$0xff]
    %v1086 = vld [vmem:[%s4 + $0x1a0] sm:$0xff]
    %v1087 = vld [vmem:[%s4 + $0x1a8] sm:$0xff]
    %v1088 = vld [vmem:[%s4 + $0x1b0] sm:$0xff]
    %v1089 = vld [vmem:[%s4 + $0x1b8] sm:$0xff]
    %v1090 = vld [vmem:[%s4 + $0x1c0] sm:$0xff]
    %v1091 = vld [vmem:[%s4 + $0x1c8] sm:$0xff]
    %v1092 = vld [vmem:[%s4 + $0x1d0] sm:$0xff]
    %v1093 = vld [vmem:[%s4 + $0x1d8] sm:$0xff]
    %v1094 = vld [vmem:[%s4 + $0x1e0] sm:$0xff]
    %v1095 = vld [vmem:[%s4 + $0x1e8] sm:$0xff]
    %v1096 = vld [vmem:[%s4 + $0x1f0] sm:$0xff]
    %v1097 = vld [vmem:[%s4 + $0x1f8] sm:$0xff]
    %v1098 = vld [vmem:[%s5] sm:$0x3]
    %v1100 = vlaneseq
    %v1101 = vshrl.u32 %v1100, 7
    %v1102 = vsub.s32 0, %v1101
    %v1103 = vrot.slane %v1098, %v1102
    %v1104 = vlaneseq
    %v1105 = vshrl.u32 %v1104, 7
    %v1106 = vsub.s32 1, %v1105
    %v1107 = vrot.slane %v1098, %v1106
    %v1174 = vunpack.c.l.b16 %v1034
    %v1175 = vunpack.c.h.b16 %v1034
    %v1176 = vunpack.c.l.b16 %v1035
    %v1177 = vunpack.c.h.b16 %v1035
    %v1178 = vunpack.c.l.b16 %v1036
    %v1179 = vunpack.c.h.b16 %v1036
    %v1180 = vunpack.c.l.b16 %v1037
    %v1181 = vunpack.c.h.b16 %v1037
    %v1182 = vunpack.c.l.b16 %v1038
    %v1183 = vunpack.c.h.b16 %v1038
    %v1184 = vunpack.c.l.b16 %v1039
    %v1185 = vunpack.c.h.b16 %v1039
    %v1186 = vunpack.c.l.b16 %v1040
    %v1187 = vunpack.c.h.b16 %v1040
    %v1188 = vunpack.c.l.b16 %v1041
    %v1189 = vunpack.c.h.b16 %v1041
    %v1190 = vunpack.c.l.b16 %v1042
    %v1191 = vunpack.c.h.b16 %v1042
    %v1192 = vunpack.c.l.b16 %v1043
    %v1193 = vunpack.c.h.b16 %v1043
    %v1194 = vunpack.c.l.b16 %v1044
    %v1195 = vunpack.c.h.b16 %v1044
    %v1196 = vunpack.c.l.b16 %v1045
    %v1197 = vunpack.c.h.b16 %v1045
    %v1198 = vunpack.c.l.b16 %v1046
    %v1199 = vunpack.c.h.b16 %v1046
    %v1200 = vunpack.c.l.b16 %v1047
    %v1201 = vunpack.c.h.b16 %v1047
    %v1202 = vunpack.c.l.b16 %v1048
    %v1203 = vunpack.c.h.b16 %v1048
    %v1204 = vunpack.c.l.b16 %v1049
    %v1205 = vunpack.c.h.b16 %v1049
    %v1206 = vunpack.c.l.b16 %v1050
    %v1207 = vunpack.c.h.b16 %v1050
    %v1208 = vunpack.c.l.b16 %v1051
    %v1209 = vunpack.c.h.b16 %v1051
    %v1210 = vunpack.c.l.b16 %v1052
    %v1211 = vunpack.c.h.b16 %v1052
    %v1212 = vunpack.c.l.b16 %v1053
    %v1213 = vunpack.c.h.b16 %v1053
    %v1214 = vunpack.c.l.b16 %v1054
    %v1215 = vunpack.c.h.b16 %v1054
    %v1216 = vunpack.c.l.b16 %v1055
    %v1217 = vunpack.c.h.b16 %v1055
    %v1218 = vunpack.c.l.b16 %v1056
    %v1219 = vunpack.c.h.b16 %v1056
    %v1220 = vunpack.c.l.b16 %v1057
    %v1221 = vunpack.c.h.b16 %v1057
    %v1222 = vunpack.c.l.b16 %v1058
    %v1223 = vunpack.c.h.b16 %v1058
    %v1224 = vunpack.c.l.b16 %v1059
    %v1225 = vunpack.c.h.b16 %v1059
    %v1226 = vunpack.c.l.b16 %v1060
    %v1227 = vunpack.c.h.b16 %v1060
    %v1228 = vunpack.c.l.b16 %v1061
    %v1229 = vunpack.c.h.b16 %v1061
    %v1230 = vunpack.c.l.b16 %v1062
    %v1231 = vunpack.c.h.b16 %v1062
    %v1232 = vunpack.c.l.b16 %v1063
    %v1233 = vunpack.c.h.b16 %v1063
    %v1234 = vunpack.c.l.b16 %v1064
    %v1235 = vunpack.c.h.b16 %v1064
    %v1236 = vunpack.c.l.b16 %v1065
    %v1237 = vunpack.c.h.b16 %v1065
    %v1238 = vunpack.c.l.b16 %v1066
    %v1239 = vunpack.c.h.b16 %v1066
    %v1240 = vunpack.c.l.b16 %v1067
    %v1241 = vunpack.c.h.b16 %v1067
    %v1242 = vunpack.c.l.b16 %v1068
    %v1243 = vunpack.c.h.b16 %v1068
    %v1244 = vunpack.c.l.b16 %v1069
    %v1245 = vunpack.c.h.b16 %v1069
    %v1246 = vunpack.c.l.b16 %v1070
    %v1247 = vunpack.c.h.b16 %v1070
    %v1248 = vunpack.c.l.b16 %v1071
    %v1249 = vunpack.c.h.b16 %v1071
    %v1250 = vunpack.c.l.b16 %v1072
    %v1251 = vunpack.c.h.b16 %v1072
    %v1252 = vunpack.c.l.b16 %v1073
    %v1253 = vunpack.c.h.b16 %v1073
    %v1254 = vunpack.c.l.b16 %v1074
    %v1255 = vunpack.c.h.b16 %v1074
    %v1256 = vunpack.c.l.b16 %v1075
    %v1257 = vunpack.c.h.b16 %v1075
    %v1258 = vunpack.c.l.b16 %v1076
    %v1259 = vunpack.c.h.b16 %v1076
    %v1260 = vunpack.c.l.b16 %v1077
    %v1261 = vunpack.c.h.b16 %v1077
    %v1262 = vunpack.c.l.b16 %v1078
    %v1263 = vunpack.c.h.b16 %v1078
    %v1264 = vunpack.c.l.b16 %v1079
    %v1265 = vunpack.c.h.b16 %v1079
    %v1266 = vunpack.c.l.b16 %v1080
    %v1267 = vunpack.c.h.b16 %v1080
    %v1268 = vunpack.c.l.b16 %v1081
    %v1269 = vunpack.c.h.b16 %v1081
    %v1270 = vunpack.c.l.b16 %v1082
    %v1271 = vunpack.c.h.b16 %v1082
    %v1272 = vunpack.c.l.b16 %v1083
    %v1273 = vunpack.c.h.b16 %v1083
    %v1274 = vunpack.c.l.b16 %v1084
    %v1275 = vunpack.c.h.b16 %v1084
    %v1276 = vunpack.c.l.b16 %v1085
    %v1277 = vunpack.c.h.b16 %v1085
    %v1278 = vunpack.c.l.b16 %v1086
    %v1279 = vunpack.c.h.b16 %v1086
    %v1280 = vunpack.c.l.b16 %v1087
    %v1281 = vunpack.c.h.b16 %v1087
    %v1282 = vunpack.c.l.b16 %v1088
    %v1283 = vunpack.c.h.b16 %v1088
    %v1284 = vunpack.c.l.b16 %v1089
    %v1285 = vunpack.c.h.b16 %v1089
    %v1286 = vunpack.c.l.b16 %v1090
    %v1287 = vunpack.c.h.b16 %v1090
    %v1288 = vunpack.c.l.b16 %v1091
    %v1289 = vunpack.c.h.b16 %v1091
    %v1290 = vunpack.c.l.b16 %v1092
    %v1291 = vunpack.c.h.b16 %v1092
    %v1292 = vunpack.c.l.b16 %v1093
    %v1293 = vunpack.c.h.b16 %v1093
    %v1294 = vunpack.c.l.b16 %v1094
    %v1295 = vunpack.c.h.b16 %v1094
    %v1296 = vunpack.c.l.b16 %v1095
    %v1297 = vunpack.c.h.b16 %v1095
    %v1298 = vunpack.c.l.b16 %v1096
    %v1299 = vunpack.c.h.b16 %v1096
    %v1300 = vunpack.c.l.b16 %v1097
    %v1301 = vunpack.c.h.b16 %v1097
    %v1302 = vpack.c.b16 %v1176, %v1174
    %v1303 = vpack.c.b16 %v1177, %v1175
    %v1304 = vpack.c.b16 %v1180, %v1178
    %v1305 = vpack.c.b16 %v1181, %v1179
    %v1306 = vpack.c.b16 %v1184, %v1182
    %v1307 = vpack.c.b16 %v1185, %v1183
    %v1308 = vpack.c.b16 %v1188, %v1186
    %v1309 = vpack.c.b16 %v1189, %v1187
    %v1310 = vpack.c.b16 %v1192, %v1190
    %v1311 = vpack.c.b16 %v1193, %v1191
    %v1312 = vpack.c.b16 %v1196, %v1194
    %v1313 = vpack.c.b16 %v1197, %v1195
    %v1314 = vpack.c.b16 %v1200, %v1198
    %v1315 = vpack.c.b16 %v1201, %v1199
    %v1316 = vpack.c.b16 %v1204, %v1202
    %v1317 = vpack.c.b16 %v1205, %v1203
    %v1318 = vpack.c.b16 %v1208, %v1206
    %v1319 = vpack.c.b16 %v1209, %v1207
    %v1320 = vpack.c.b16 %v1212, %v1210
    %v1321 = vpack.c.b16 %v1213, %v1211
    %v1322 = vpack.c.b16 %v1216, %v1214
    %v1323 = vpack.c.b16 %v1217, %v1215
    %v1324 = vpack.c.b16 %v1220, %v1218
    %v1325 = vpack.c.b16 %v1221, %v1219
    %v1326 = vpack.c.b16 %v1224, %v1222
    %v1327 = vpack.c.b16 %v1225, %v1223
    %v1328 = vpack.c.b16 %v1228, %v1226
    %v1329 = vpack.c.b16 %v1229, %v1227
    %v1330 = vpack.c.b16 %v1232, %v1230
    %v1331 = vpack.c.b16 %v1233, %v1231
    %v1332 = vpack.c.b16 %v1236, %v1234
    %v1333 = vpack.c.b16 %v1237, %v1235
    %v1334 = vpack.c.b16 %v1240, %v1238
    %v1335 = vpack.c.b16 %v1241, %v1239
    %v1336 = vpack.c.b16 %v1244, %v1242
    %v1337 = vpack.c.b16 %v1245, %v1243
    %v1338 = vpack.c.b16 %v1248, %v1246
    %v1339 = vpack.c.b16 %v1249, %v1247
    %v1340 = vpack.c.b16 %v1252, %v1250
    %v1341 = vpack.c.b16 %v1253, %v1251
    %v1342 = vpack.c.b16 %v1256, %v1254
    %v1343 = vpack.c.b16 %v1257, %v1255
    %v1344 = vpack.c.b16 %v1260, %v1258
    %v1345 = vpack.c.b16 %v1261, %v1259
    %v1346 = vpack.c.b16 %v1264, %v1262
    %v1347 = vpack.c.b16 %v1265, %v1263
    %v1348 = vpack.c.b16 %v1268, %v1266
    %v1349 = vpack.c.b16 %v1269, %v1267
    %v1350 = vpack.c.b16 %v1272, %v1270
    %v1351 = vpack.c.b16 %v1273, %v1271
    %v1352 = vpack.c.b16 %v1276, %v1274
    %v1353 = vpack.c.b16 %v1277, %v1275
    %v1354 = vpack.c.b16 %v1280, %v1278
    %v1355 = vpack.c.b16 %v1281, %v1279
    %v1356 = vpack.c.b16 %v1284, %v1282
    %v1357 = vpack.c.b16 %v1285, %v1283
    %v1358 = vpack.c.b16 %v1288, %v1286
    %v1359 = vpack.c.b16 %v1289, %v1287
    %v1360 = vpack.c.b16 %v1292, %v1290
    %v1361 = vpack.c.b16 %v1293, %v1291
    %v1362 = vpack.c.b16 %v1296, %v1294
    %v1363 = vpack.c.b16 %v1297, %v1295
    %v1364 = vpack.c.b16 %v1300, %v1298
    %v1365 = vpack.c.b16 %v1301, %v1299
    %1430 = vmatprep.subr.bf16.mxu0 %v1303
    %1431 = vmatpush1.bf16.msra.mxu0 %v1302
    %1432 = vmatprep.subr.bf16.mxu0 %v1305
    %1433 = vmatpush1.bf16.msra.mxu0 %v1304
    %1434 = vmatprep.subr.bf16.mxu0 %v1307
    %1435 = vmatpush1.bf16.msra.mxu0 %v1306
    %1436 = vmatprep.subr.bf16.mxu0 %v1309
    %1437 = vmatpush1.bf16.msra.mxu0 %v1308
    %1438 = vmatprep.subr.bf16.mxu0 %v1311
    %1439 = vmatpush1.bf16.msra.mxu0 %v1310
    %1440 = vmatprep.subr.bf16.mxu0 %v1313
    %1441 = vmatpush1.bf16.msra.mxu0 %v1312
    %1442 = vmatprep.subr.bf16.mxu0 %v1315
    %1443 = vmatpush1.bf16.msra.mxu0 %v1314
    %1444 = vmatprep.subr.bf16.mxu0 %v1317
    %1445 = vmatpush1.bf16.msra.mxu0 %v1316
    %1446 = vmatprep.subr.bf16.mxu0 %v1319
    %1447 = vmatpush1.bf16.msra.mxu0 %v1318
    %1448 = vmatprep.subr.bf16.mxu0 %v1321
    %1449 = vmatpush1.bf16.msra.mxu0 %v1320
    %1450 = vmatprep.subr.bf16.mxu0 %v1323
    %1451 = vmatpush1.bf16.msra.mxu0 %v1322
    %1452 = vmatprep.subr.bf16.mxu0 %v1325
    %1453 = vmatpush1.bf16.msra.mxu0 %v1324
    %1454 = vmatprep.subr.bf16.mxu0 %v1327
    %1455 = vmatpush1.bf16.msra.mxu0 %v1326
    %1456 = vmatprep.subr.bf16.mxu0 %v1329
    %1457 = vmatpush1.bf16.msra.mxu0 %v1328
    %1458 = vmatprep.subr.bf16.mxu0 %v1331
    %1459 = vmatpush1.bf16.msra.mxu0 %v1330
    %1460 = vmatprep.subr.bf16.mxu0 %v1333
    %1461 = vmatpush1.bf16.msra.mxu0 %v1332
    %1462 = vmatprep.mubr.bf16.mxu0 %v1031
    %1463 = vmatmul.mubr.bf16.gmra.mrb[0].mxu0 %v1030
    %v1464 = vpop.f32.mrb[0].mxu0
    %v1465 = vadd.f32 %v1103, %v1464
    %v1466 = vpop.f32.mrb[0].mxu0
    %v1467 = vadd.f32 %v1107, %v1466
    %v1468 = vpop.f32.mrb[0].mxu0
    %v1469 = vpop.f32.mrb[0].mxu0
    %1470 = vdwg.mxu0
    %1471 = vmatprep.subr.bf16.mxu0 %v1335
    %1472 = vmatpush1.bf16.msra.mxu0 %v1334
    %1473 = vmatprep.subr.bf16.mxu0 %v1337
    %1474 = vmatpush1.bf16.msra.mxu0 %v1336
    %1475 = vmatprep.subr.bf16.mxu0 %v1339
    %1476 = vmatpush1.bf16.msra.mxu0 %v1338
    %1477 = vmatprep.subr.bf16.mxu0 %v1341
    %1478 = vmatpush1.bf16.msra.mxu0 %v1340
    %1479 = vmatprep.subr.bf16.mxu0 %v1343
    %1480 = vmatpush1.bf16.msra.mxu0 %v1342
    %1481 = vmatprep.subr.bf16.mxu0 %v1345
    %1482 = vmatpush1.bf16.msra.mxu0 %v1344
    %1483 = vmatprep.subr.bf16.mxu0 %v1347
    %1484 = vmatpush1.bf16.msra.mxu0 %v1346
    %1485 = vmatprep.subr.bf16.mxu0 %v1349
    %1486 = vmatpush1.bf16.msra.mxu0 %v1348
    %1487 = vmatprep.subr.bf16.mxu0 %v1351
    %1488 = vmatpush1.bf16.msra.mxu0 %v1350
    %1489 = vmatprep.subr.bf16.mxu0 %v1353
    %1490 = vmatpush1.bf16.msra.mxu0 %v1352
    %1491 = vmatprep.subr.bf16.mxu0 %v1355
    %1492 = vmatpush1.bf16.msra.mxu0 %v1354
    %1493 = vmatprep.subr.bf16.mxu0 %v1357
    %1494 = vmatpush1.bf16.msra.mxu0 %v1356
    %1495 = vmatprep.subr.bf16.mxu0 %v1359
    %1496 = vmatpush1.bf16.msra.mxu0 %v1358
    %1497 = vmatprep.subr.bf16.mxu0 %v1361
    %1498 = vmatpush1.bf16.msra.mxu0 %v1360
    %1499 = vmatprep.subr.bf16.mxu0 %v1363
    %1500 = vmatpush1.bf16.msra.mxu0 %v1362
    %1501 = vmatprep.subr.bf16.mxu0 %v1365
    %1502 = vmatpush1.bf16.msra.mxu0 %v1364
    %1503 = vmatprep.mubr.bf16.mxu0 %v1033
    %1504 = vmatmul.mubr.bf16.gmra.mrb[0].mxu0 %v1032
    %v1505 = vpop.f32.mrb[0].mxu0
    %v1506 = vadd.f32 %v1465, %v1505
    %v1507 = vpop.f32.mrb[0].mxu0
    %v1508 = vadd.f32 %v1467, %v1507
    %v1509 = vpop.f32.mrb[0].mxu0
    %v1510 = vpop.f32.mrb[0].mxu0
    %1511 = vdwg.mxu0
    %v1512 = vmax.f32 %v1506, 0.0
    %v1513 = vmax.f32 %v1508, 0.0
    %v1514 = vpack.c.bf16 %v1512, %v1512
    %v1515 = vpack.c.bf16 %v1513, %v1513
    %v1516 = vld [vmem:[%s6] sm:$0xf]
    %v1517 = vld [vmem:[%s6 + $0x4] sm:$0xf]
    %v1518 = vld [vmem:[%s6 + $0x8] sm:$0xf]
    %v1519 = vld [vmem:[%s6 + $0xc] sm:$0xf]
    %v1520 = vld [vmem:[%s6 + $0x10] sm:$0xf]
    %v1521 = vld [vmem:[%s6 + $0x14] sm:$0xf]
    %v1522 = vld [vmem:[%s6 + $0x18] sm:$0xf]
    %v1523 = vld [vmem:[%s6 + $0x1c] sm:$0xf]
    %v1524 = vld [vmem:[%s6 + $0x20] sm:$0xf]
    %v1525 = vld [vmem:[%s6 + $0x24] sm:$0xf]
    %v1526 = vld [vmem:[%s6 + $0x28] sm:$0xf]
    %v1527 = vld [vmem:[%s6 + $0x2c] sm:$0xf]
    %v1528 = vld [vmem:[%s6 + $0x30] sm:$0xf]
    %v1529 = vld [vmem:[%s6 + $0x34] sm:$0xf]
    %v1530 = vld [vmem:[%s6 + $0x38] sm:$0xf]
    %v1531 = vld [vmem:[%s6 + $0x3c] sm:$0xf]
    %v1532 = vld [vmem:[%s6 + $0x40] sm:$0xf]
    %v1533 = vld [vmem:[%s6 + $0x44] sm:$0xf]
    %v1534 = vld [vmem:[%s6 + $0x48] sm:$0xf]
    %v1535 = vld [vmem:[%s6 + $0x4c] sm:$0xf]
    %v1536 = vld [vmem:[%s6 + $0x50] sm:$0xf]
    %v1537 = vld [vmem:[%s6 + $0x54] sm:$0xf]
    %v1538 = vld [vmem:[%s6 + $0x58] sm:$0xf]
    %v1539 = vld [vmem:[%s6 + $0x5c] sm:$0xf]
    %v1540 = vld [vmem:[%s6 + $0x60] sm:$0xf]
    %v1541 = vld [vmem:[%s6 + $0x64] sm:$0xf]
    %v1542 = vld [vmem:[%s6 + $0x68] sm:$0xf]
    %v1543 = vld [vmem:[%s6 + $0x6c] sm:$0xf]
    %v1544 = vld [vmem:[%s6 + $0x70] sm:$0xf]
    %v1545 = vld [vmem:[%s6 + $0x74] sm:$0xf]
    %v1546 = vld [vmem:[%s6 + $0x78] sm:$0xf]
    %v1547 = vld [vmem:[%s6 + $0x7c] sm:$0xf]
    %v1548 = vld [vmem:[%s7] sm:$0x1]
    %v1550 = vlaneseq
    %v1551 = vshrl.u32 %v1550, 7
    %v1552 = vsub.s32 0, %v1551
    %v1553 = vrot.slane %v1548, %v1552
    %v1587 = vunpack.c.l.b16 %v1516
    %v1588 = vunpack.c.l.b16 %v1517
    %v1589 = vunpack.c.l.b16 %v1518
    %v1590 = vunpack.c.l.b16 %v1519
    %v1591 = vunpack.c.l.b16 %v1520
    %v1592 = vunpack.c.l.b16 %v1521
    %v1593 = vunpack.c.l.b16 %v1522
    %v1594 = vunpack.c.l.b16 %v1523
    %v1595 = vunpack.c.l.b16 %v1524
    %v1596 = vunpack.c.l.b16 %v1525
    %v1597 = vunpack.c.l.b16 %v1526
    %v1598 = vunpack.c.l.b16 %v1527
    %v1599 = vunpack.c.l.b16 %v1528
    %v1600 = vunpack.c.l.b16 %v1529
    %v1601 = vunpack.c.l.b16 %v1530
    %v1602 = vunpack.c.l.b16 %v1531
    %v1603 = vunpack.c.l.b16 %v1532
    %v1604 = vunpack.c.l.b16 %v1533
    %v1605 = vunpack.c.l.b16 %v1534
    %v1606 = vunpack.c.l.b16 %v1535
    %v1607 = vunpack.c.l.b16 %v1536
    %v1608 = vunpack.c.l.b16 %v1537
    %v1609 = vunpack.c.l.b16 %v1538
    %v1610 = vunpack.c.l.b16 %v1539
    %v1611 = vunpack.c.l.b16 %v1540
    %v1612 = vunpack.c.l.b16 %v1541
    %v1613 = vunpack.c.l.b16 %v1542
    %v1614 = vunpack.c.l.b16 %v1543
    %v1615 = vunpack.c.l.b16 %v1544
    %v1616 = vunpack.c.l.b16 %v1545
    %v1617 = vunpack.c.l.b16 %v1546
    %v1618 = vunpack.c.l.b16 %v1547
    %v1619 = vpack.c.b16 %v1588, %v1587
    %v1620 = vpack.c.b16 %v1590, %v1589
    %v1621 = vpack.c.b16 %v1592, %v1591
    %v1622 = vpack.c.b16 %v1594, %v1593
    %v1623 = vpack.c.b16 %v1596, %v1595
    %v1624 = vpack.c.b16 %v1598, %v1597
    %v1625 = vpack.c.b16 %v1600, %v1599
    %v1626 = vpack.c.b16 %v1602, %v1601
    %v1627 = vpack.c.b16 %v1604, %v1603
    %v1628 = vpack.c.b16 %v1606, %v1605
    %v1629 = vpack.c.b16 %v1608, %v1607
    %v1630 = vpack.c.b16 %v1610, %v1609
    %v1631 = vpack.c.b16 %v1612, %v1611
    %v1632 = vpack.c.b16 %v1614, %v1613
    %v1633 = vpack.c.b16 %v1616, %v1615
    %v1634 = vpack.c.b16 %v1618, %v1617
    %1651 = vmatprep.subr.bf16.mxu0 0
    %1652 = vmatpush1.bf16.msra.mxu0 %v1619
    %1653 = vmatprep.subr.bf16.mxu0 0
    %1654 = vmatpush1.bf16.msra.mxu0 %v1620
    %1655 = vmatprep.subr.bf16.mxu0 0
    %1656 = vmatpush1.bf16.msra.mxu0 %v1621
    %1657 = vmatprep.subr.bf16.mxu0 0
    %1658 = vmatpush1.bf16.msra.mxu0 %v1622
    %1659 = vmatprep.subr.bf16.mxu0 0
    %1660 = vmatpush1.bf16.msra.mxu0 %v1623
    %1661 = vmatprep.subr.bf16.mxu0 0
    %1662 = vmatpush1.bf16.msra.mxu0 %v1624
    %1663 = vmatprep.subr.bf16.mxu0 0
    %1664 = vmatpush1.bf16.msra.mxu0 %v1625
    %1665 = vmatprep.subr.bf16.mxu0 0
    %1666 = vmatpush1.bf16.msra.mxu0 %v1626
    %1667 = vmatprep.subr.bf16.mxu0 0
    %1668 = vmatpush1.bf16.msra.mxu0 %v1627
    %1669 = vmatprep.subr.bf16.mxu0 0
    %1670 = vmatpush1.bf16.msra.mxu0 %v1628
    %1671 = vmatprep.subr.bf16.mxu0 0
    %1672 = vmatpush1.bf16.msra.mxu0 %v1629
    %1673 = vmatprep.subr.bf16.mxu0 0
    %1674 = vmatpush1.bf16.msra.mxu0 %v1630
    %1675 = vmatprep.subr.bf16.mxu0 0
    %1676 = vmatpush1.bf16.msra.mxu0 %v1631
    %1677 = vmatprep.subr.bf16.mxu0 0
    %1678 = vmatpush1.bf16.msra.mxu0 %v1632
    %1679 = vmatprep.subr.bf16.mxu0 0
    %1680 = vmatpush1.bf16.msra.mxu0 %v1633
    %1681 = vmatprep.subr.bf16.mxu0 0
    %1682 = vmatpush1.bf16.msra.mxu0 %v1634
    %1683 = vmatprep.mubr.bf16.mxu0 %v1515
    %1684 = vmatmul.mubr.bf16.gmra.mrb[0].mxu0 %v1514
    %v1685 = vpop.f32.mrb[0].mxu0
    %v1686 = vadd.f32 %v1553, %v1685
    %v1687 = vpop.f32.mrb[0].mxu0
    %v1688 = vpop.f32.mrb[0].mxu0
    %v1689 = vpop.f32.mrb[0].mxu0
    %1690 = vdwg.mxu0
    %1691 = vst [vmem:[#allocation3] sm:$0xff] %v1686
    // Predicated region
    $region34: #{dnn_classifier_forward.1} parent=1 // pred_check
      _
    $region35: #{dnn_classifier_forward.1} parent=1 // pred_check_branch
      %1693 = sbr.rel (0) target = $region37
    $region36: #{dnn_classifier_forward.1} parent=1 // pred_region
      %s1695 = ssub.s32 128, 32
      %1696 = vsyncadd [#allocation4], %s1695
      %s1697 = sshll.u32 [#allocation3], 4
      %s1698 = int_to_ptr.vmem [resolvable:$true] %s1697
      %1703 = dma.vmem_to_hbm [thread:$0]  %s1698, 32, %s8, [#allocation4], 32, 32, 2
    $region37: #{dnn_classifier_forward.1} parent=1 // pred_fallthru
      _
    // Predicated region
    $region38: #{dnn_classifier_forward.1} parent=1 // pred_check
      _
    $region39: #{dnn_classifier_forward.1} parent=1 // pred_check_branch
      %1705 = sbr.rel (0) target = $region41
    $region40: #{dnn_classifier_forward.1} parent=1 // pred_region
      %1706 = dma.done [#allocation4], 128
    $region41: #{dnn_classifier_forward.1} parent=1 // pred_fallthru
      _
    %1707 = vsyncpa [#allocation4], 1

</llo_original>
